<compile_context>
chip_gen: v6e
topology: v6e:2x2x1
jax: 0.10.0
libtpu: 0.0.40
codegen_flags: <defaults>
</compile_context>

<pallas_src>
import jax
import jax.numpy as jnp
from jax import lax
from jax.experimental import pallas as pl
from jax.experimental.pallas import tpu as pltpu

BETA = 0.88
THRESHOLD = 1.0
NUM_HIDDEN = 500
NUM_OUT = 3
H_PAD = 512   # hidden padded to a multiple of 128 (lane-dense)
O_PAD = 128   # readout padded to one full lane register


def _snn_block_kernel(spk_ref, mem0_ref, wrec_ref, brec_ref, wro_ref, bro_ref,
                      spk1_ref, mem2_ref, out_ref, mem_state, h_scratch):
    TT, B, H = spk_ref.shape
    blk = pl.program_id(0)

    # Load the initial membrane state into the resident VMEM scratch once.
    @pl.when(blk == 0)
    def _():
        mem_state[...] = mem0_ref[...]

    # (1) One recurrent matmul for the whole time-block (MXU, bf16 x bf16 ->
    #     f32 accumulate).  0.25 scale / +0.15 shift already folded into
    #     wrec/brec; the bias broadcast happens once per block.
    s_in = spk_ref[...].reshape(TT * B, H)
    h_all = jnp.dot(s_in, wrec_ref[...], preferred_element_type=jnp.float32)
    h_scratch[...] = (h_all + brec_ref[...]).reshape(TT, B, H)

    # (2) Serial membrane recurrence (snntorch Leaky, reset-by-subtraction).
    #     Pure VPU elementwise, unrolled for LLO scheduling visibility.
    #     Spike/reset use the strict (mem - threshold > 0) convention of
    #     snntorch's surrogate forward (heaviside at exactly 0 -> 0).
    def step(t, mem):
        reset = (mem > THRESHOLD).astype(jnp.float32)
        mem_new = BETA * mem + h_scratch[t] - reset * THRESHOLD
        spk1_ref[t] = (mem_new > THRESHOLD).astype(jnp.bfloat16)  # exact 0/1
        mem2_ref[t] = mem_new
        return mem_new

    mem_state[...] = lax.fori_loop(0, TT, step, mem_state[...], unroll=True)

    # (3) One readout matmul per block over all TT*B spike rows (MXU).
    s_all = spk1_ref[...].reshape(TT * B, H)
    out_all = jnp.dot(s_all, wro_ref[...], preferred_element_type=jnp.float32)
    out_ref[...] = (out_all + bro_ref[...]).reshape(TT, B, O_PAD)


def prepare_params(w_rec, b_rec, w_ro, b_ro):
    """One-time parameter prep (outside the hot path).

    w_rec: [H, H] torch layout [out, in];  b_rec: [H]
    w_ro:  [3, H] torch layout [out, in];  b_ro:  [3]
    Folds the 0.25 scale / 0.15 shift, transposes to [in, out], pads
    500 -> 512 / 3 -> 128, casts weight matrices to bfloat16.
    """
    w_rec = jnp.asarray(w_rec, jnp.float32)
    b_rec = jnp.asarray(b_rec, jnp.float32)
    w_ro = jnp.asarray(w_ro, jnp.float32)
    b_ro = jnp.asarray(b_ro, jnp.float32)

    wrec_t = (0.25 * w_rec).T                                   # [in, out]
    wrec_p = jnp.zeros((H_PAD, H_PAD), jnp.float32)
    wrec_p = wrec_p.at[:NUM_HIDDEN, :NUM_HIDDEN].set(wrec_t)
    brec_p = jnp.zeros((1, H_PAD), jnp.float32)
    brec_p = brec_p.at[0, :NUM_HIDDEN].set(0.25 * b_rec + 0.15)

    wro_p = jnp.zeros((H_PAD, O_PAD), jnp.float32)
    wro_p = wro_p.at[:NUM_HIDDEN, :NUM_OUT].set(w_ro.T)         # [in, out]
    bro_p = jnp.zeros((1, O_PAD), jnp.float32)
    bro_p = bro_p.at[0, :NUM_OUT].set(b_ro)

    return dict(
        w_rec=wrec_p.astype(jnp.bfloat16),   # padded lanes are exactly zero
        b_rec=brec_p,
        w_ro=wro_p.astype(jnp.bfloat16),
        b_ro=bro_p,
    )


def self_evolving_snn_sequence(spikes_seq, mem2, params, *, tt=32, unpad=False):
    """Run T timesteps as ceil(T/TT) fused, time-blocked pallas_call steps.

    spikes_seq: [T, B, NUM_HIDDEN] external input spikes per step
    mem2:       [B, NUM_HIDDEN]    initial membrane potential
    Returns (spk1_seq, mem2_seq, out_seq) identical to calling the module
    forward T times while carrying mem2.  By default outputs stay lane-padded
    (512 / 128 lanes; spk1 in bf16 with exact 0/1 values) -- pass unpad=True
    to slice back to 500 / 3 at the consumer.
    """
    T, B, H = spikes_seq.shape
    assert H == NUM_HIDDEN

    TT = max(1, min(int(tt), T))           # keep TT <= 128 on v7x (VMEM)
    n_blk = -(-T // TT)                    # ceil
    T_pad = n_blk * TT

    spk = jnp.asarray(spikes_seq, jnp.float32)
    spk = jnp.pad(spk, ((0, T_pad - T), (0, 0), (0, H_PAD - H)))
    spk = spk.astype(jnp.bfloat16)                       # 0/1 -> exact in bf16
    mem_p = jnp.pad(jnp.asarray(mem2, jnp.float32), ((0, 0), (0, H_PAD - H)))

    grid_spec = pltpu.PrefetchScalarGridSpec(
        num_scalar_prefetch=0,
        grid=(n_blk,),
        in_specs=[
            pl.BlockSpec((TT, B, H_PAD), lambda i: (i, 0, 0)),  # spikes block streamed
            pl.BlockSpec((B, H_PAD), lambda i: (0, 0)),         # initial mem (resident)
            pl.BlockSpec((H_PAD, H_PAD), lambda i: (0, 0)),     # W_rec' (resident)
            pl.BlockSpec((1, H_PAD), lambda i: (0, 0)),         # b_rec' (resident)
            pl.BlockSpec((H_PAD, O_PAD), lambda i: (0, 0)),     # W_ro'  (resident)
            pl.BlockSpec((1, O_PAD), lambda i: (0, 0)),         # b_ro'  (resident)
        ],
        out_specs=(
            pl.BlockSpec((TT, B, H_PAD), lambda i: (i, 0, 0)),  # spk1 block (bf16)
            pl.BlockSpec((TT, B, H_PAD), lambda i: (i, 0, 0)),  # mem2 block (f32)
            pl.BlockSpec((TT, B, O_PAD), lambda i: (i, 0, 0)),  # out  block (f32)
        ),
        scratch_shapes=[
            pltpu.VMEM((B, H_PAD), jnp.float32),        # membrane state (carried)
            pltpu.VMEM((TT, B, H_PAD), jnp.float32),    # h block scratch
        ],
    )

    spk1_seq, mem2_seq, out_seq = pl.pallas_call(
        _snn_block_kernel,
        out_shape=(
            jax.ShapeDtypeStruct((T_pad, B, H_PAD), jnp.bfloat16),
            jax.ShapeDtypeStruct((T_pad, B, H_PAD), jnp.float32),
            jax.ShapeDtypeStruct((T_pad, B, O_PAD), jnp.float32),
        ),
        grid_spec=grid_spec,
        compiler_params=pltpu.CompilerParams(
            dimension_semantics=("arbitrary",)),   # state carries across blocks
    )(spk, mem_p, params["w_rec"], params["b_rec"],
      params["w_ro"], params["b_ro"])

    if T_pad != T:           # leading-axis slice only (lane layout preserved)
        spk1_seq, mem2_seq, out_seq = spk1_seq[:T], mem2_seq[:T], out_seq[:T]

    if unpad:
        return (spk1_seq[..., :NUM_HIDDEN].astype(jnp.float32),
                mem2_seq[..., :NUM_HIDDEN],
                out_seq[..., :NUM_OUT])
    return spk1_seq, mem2_seq, out_seq


def self_evolving_snn_forward(spikes, mem2, params):
    """One module-equivalent forward step: (spikes, mem2) -> (spk1, mem2, out)."""
    spk1, mem2_new, out = self_evolving_snn_sequence(
        spikes[None], mem2, params, tt=1, unpad=True)
    return spk1[0], mem2_new[0], out[0]


def _reference_sequence(spikes_seq, mem2, params):
    """Pure-JAX f32 reference using the same prepped (bf16-rounded) params."""
    wrec = params["w_rec"].astype(jnp.float32)
    brec = params["b_rec"][0]
    wro = params["w_ro"].astype(jnp.float32)
    bro = params["b_ro"][0]

    T, B, H = spikes_seq.shape
    spk_p = jnp.pad(jnp.asarray(spikes_seq, jnp.float32),
                    ((0, 0), (0, 0), (0, H_PAD - H)))
    mem0 = jnp.pad(jnp.asarray(mem2, jnp.float32), ((0, 0), (0, H_PAD - H)))

    def step(mem, spk_t):
        h = spk_t @ wrec + brec
        reset = (mem > THRESHOLD).astype(jnp.float32)
        mem_new = BETA * mem + h - reset * THRESHOLD
        s = (mem_new > THRESHOLD).astype(jnp.float32)
        o = s @ wro + bro
        return mem_new, (s, mem_new, o)

    _, (spks, mems, outs) = jax.lax.scan(step, mem0, spk_p)
    return (spks[..., :NUM_HIDDEN], mems[..., :NUM_HIDDEN], outs[..., :NUM_OUT])


if __name__ == "__main__":
    key = jax.random.PRNGKey(0)
    k1, k2, k3, k4, k5, k6 = jax.random.split(key, 6)

    B, H, T = 8, NUM_HIDDEN, 8

    # Deterministic parameter init (uniform, 1/sqrt(fan_in) like nn.Linear).
    lim = 1.0 / jnp.sqrt(jnp.float32(H))
    w_rec = jax.random.uniform(k1, (H, H), jnp.float32, -lim, lim)     # [out, in]
    b_rec = jax.random.uniform(k2, (H,), jnp.float32, -lim, lim)
    w_ro = jax.random.uniform(k3, (NUM_OUT, H), jnp.float32, -lim, lim)
    b_ro = jax.random.uniform(k4, (NUM_OUT,), jnp.float32, -lim, lim)

    params = prepare_params(w_rec, b_rec, w_ro, b_ro)  # one-time, outside hot path

    spikes_seq = (jax.random.uniform(k5, (T, B, H)) > 0.5).astype(jnp.float32)
    mem2_init = jax.random.uniform(k6, (B, H), jnp.float32, -0.5, 1.5)

    # Fused time-blocked kernel (weights resident in VMEM, outputs kept padded).
    spk1_p, mem2_p, out_p = jax.block_until_ready(
        self_evolving_snn_sequence(spikes_seq, mem2_init, params, tt=32))

    # Single-step, module-signature call.
    spk1_0, mem2_0, out_0 = jax.block_until_ready(
        self_evolving_snn_forward(spikes_seq[0], mem2_init, params))

    # ---- correctness checks (slice to 500/3 only here, at the consumer) ----
    spk1_seq = spk1_p[..., :NUM_HIDDEN].astype(jnp.float32)
    mem2_seq = mem2_p[..., :NUM_HIDDEN]
    out_seq = out_p[..., :NUM_OUT]

    r_spk, r_mem, r_out = _reference_sequence(spikes_seq, mem2_init, params)

    assert spk1_seq.shape == (T, B, H)
    assert mem2_seq.shape == (T, B, H)
    assert out_seq.shape == (T, B, NUM_OUT)

    # Membrane potentials match the reference closely (f32 accumulation).
    assert bool(jnp.allclose(mem2_seq, r_mem, atol=1e-4, rtol=1e-4))

    # Spikes: any disagreement could only be an exact-threshold tie caused by
    # accumulation-order rounding; in practice there are none.
    boundary = jnp.abs(r_mem - THRESHOLD) < 1e-4
    assert bool(jnp.all((spk1_seq == r_spk) | boundary))

    # Readout checked against the kernel's own spikes (decoupled from ties).
    r_out_k = jnp.einsum("tbh,ho->tbo", spk1_p.astype(jnp.float32),
                         params["w_ro"].astype(jnp.float32)) + params["b_ro"][0]
    assert bool(jnp.allclose(out_seq, r_out_k[..., :NUM_OUT], atol=1e-3, rtol=1e-3))

    # Single-step path agrees with step 0 of the fused sequence (modulo ties).
    assert bool(jnp.allclose(mem2_0, mem2_seq[0], atol=1e-5))
    assert bool(jnp.all((spk1_0 == spk1_seq[0]) | boundary[0]))
    assert bool(jnp.allclose(out_0, out_seq[0], atol=1e-4))

    print("KERNEL_OK")
</pallas_src>

<mosaic_0001>
module attributes {stable_mosaic.version = 11 : i64} {
  func.func @_snn_block_kernel(%arg0: i32, %arg1: memref<8x8x512xbf16, #tpu.memory_space<vmem>>, %arg2: memref<8x512xf32, #tpu.memory_space<vmem>>, %arg3: memref<512x512xbf16, #tpu.memory_space<vmem>>, %arg4: memref<1x512xf32, #tpu.memory_space<vmem>>, %arg5: memref<512x128xbf16, #tpu.memory_space<vmem>>, %arg6: memref<1x128xf32, #tpu.memory_space<vmem>>, %arg7: memref<8x8x512xbf16, #tpu.memory_space<vmem>>, %arg8: memref<8x8x512xf32, #tpu.memory_space<vmem>>, %arg9: memref<8x8x128xf32, #tpu.memory_space<vmem>>, %arg10: memref<8x512xf32, #tpu.memory_space<vmem>>, %arg11: memref<8x8x512xf32, #tpu.memory_space<vmem>>) attributes {dimension_semantics = [#tpu.dimension_semantics<arbitrary>], iteration_bounds = array<i64: 1>, scalar_prefetch = 0 : i64, scratch_operands = 2 : i64, tpu.core_type = #tpu.core_type<tc>, window_params = [{transform_indices = @transform_0, window_bounds = array<i64: 8, 8, 512>}, {pipeline_mode = #tpu.pipeline_mode<synchronous>, transform_indices = @transform_1, window_bounds = array<i64: 8, 512>}, {pipeline_mode = #tpu.pipeline_mode<synchronous>, transform_indices = @transform_2, window_bounds = array<i64: 512, 512>}, {pipeline_mode = #tpu.pipeline_mode<synchronous>, transform_indices = @transform_3, window_bounds = array<i64: 1, 512>}, {pipeline_mode = #tpu.pipeline_mode<synchronous>, transform_indices = @transform_4, window_bounds = array<i64: 512, 128>}, {pipeline_mode = #tpu.pipeline_mode<synchronous>, transform_indices = @transform_5, window_bounds = array<i64: 1, 128>}, {transform_indices = @transform_6, window_bounds = array<i64: 8, 8, 512>}, {transform_indices = @transform_7, window_bounds = array<i64: 8, 8, 512>}, {transform_indices = @transform_8, window_bounds = array<i64: 8, 8, 128>}]} {
    %c0_i32 = arith.constant 0 : i32
    %0 = arith.cmpi eq, %arg0, %c0_i32 : i32
    %1 = arith.extui %0 : i1 to i32
    %c0_i32_0 = arith.constant 0 : i32
    %2 = arith.cmpi ne, %1, %c0_i32_0 : i32
    scf.if %2 {
      %c0_106 = arith.constant 0 : index
      %c0_107 = arith.constant 0 : index
      %231 = vector.load %arg2[%c0_106, %c0_107] : memref<8x512xf32, #tpu.memory_space<vmem>>, vector<8x512xf32>
      %c0_108 = arith.constant 0 : index
      %c0_109 = arith.constant 0 : index
      %232 = vector.load %arg10[%c0_108, %c0_109] : memref<8x512xf32, #tpu.memory_space<vmem>>, vector<8x512xf32>
      tpu.vector_store %arg10[%c0_108, %c0_109], %231 {strides = array<i32>} : memref<8x512xf32, #tpu.memory_space<vmem>>, vector<8x512xf32>,
    } else {
    }
    %c0 = arith.constant 0 : index
    %c0_1 = arith.constant 0 : index
    %c0_2 = arith.constant 0 : index
    %3 = vector.load %arg1[%c0, %c0_1, %c0_2] : memref<8x8x512xbf16, #tpu.memory_space<vmem>>, vector<8x8x512xbf16>
    %4 = vector.shape_cast %3 : vector<8x8x512xbf16> to vector<64x512xbf16>
    %c0_3 = arith.constant 0 : index
    %c0_4 = arith.constant 0 : index
    %5 = vector.load %arg3[%c0_3, %c0_4] : memref<512x512xbf16, #tpu.memory_space<vmem>>, vector<512x512xbf16>
    %cst = arith.constant dense<0.000000e+00> : vector<64x512xf32>
    %6 = tpu.matmul %4, %5, %cst {dimension_numbers = #tpu.dot_dimension_numbers<[1], [0], [0], [1], [0, 0, 1, 1], [], []>} : vector<64x512xbf16>, vector<512x512xbf16>, vector<64x512xf32> -> vector<64x512xf32>
    %c0_5 = arith.constant 0 : index
    %c0_6 = arith.constant 0 : index
    %7 = vector.load %arg4[%c0_5, %c0_6] : memref<1x512xf32, #tpu.memory_space<vmem>>, vector<1x512xf32>
    %8 = vector.broadcast %7 : vector<1x512xf32> to vector<64x512xf32>
    %9 = arith.addf %6, %8 : vector<64x512xf32>
    %10 = vector.shape_cast %9 : vector<64x512xf32> to vector<8x8x512xf32>
    %c0_7 = arith.constant 0 : index
    %c0_8 = arith.constant 0 : index
    %c0_9 = arith.constant 0 : index
    %11 = vector.load %arg11[%c0_7, %c0_8, %c0_9] : memref<8x8x512xf32, #tpu.memory_space<vmem>>, vector<8x8x512xf32>
    tpu.vector_store %arg11[%c0_7, %c0_8, %c0_9], %10 {strides = array<i32>} : memref<8x8x512xf32, #tpu.memory_space<vmem>>, vector<8x8x512xf32>,
    %c0_10 = arith.constant 0 : index
    %c0_11 = arith.constant 0 : index
    %12 = vector.load %arg10[%c0_10, %c0_11] : memref<8x512xf32, #tpu.memory_space<vmem>>, vector<8x512xf32>
    %c0_i32_12 = arith.constant 0 : i32
    %cst_13 = arith.constant 1.000000e+00 : f32
    %13 = vector.broadcast %cst_13 : f32 to vector<8x512xf32>
    %14 = arith.cmpf ogt, %12, %13 : vector<8x512xf32>
    %15 = arith.extui %14 : vector<8x512xi1> to vector<8x512xi32>
    %16 = arith.sitofp %15 : vector<8x512xi32> to vector<8x512xf32>
    %cst_14 = arith.constant 0.879999995 : f32
    %17 = vector.broadcast %cst_14 : f32 to vector<8x512xf32>
    %18 = arith.mulf %17, %12 : vector<8x512xf32>
    %19 = arith.index_cast %c0_i32_12 : i32 to index
    %c0_15 = arith.constant 0 : index
    %c0_16 = arith.constant 0 : index
    %20 = vector.load %arg11[%19, %c0_15, %c0_16] : memref<8x8x512xf32, #tpu.memory_space<vmem>>, vector<1x8x512xf32>
    %21 = vector.shape_cast %20 : vector<1x8x512xf32> to vector<8x512xf32>
    %22 = arith.addf %18, %21 : vector<8x512xf32>
    %cst_17 = arith.constant 1.000000e+00 : f32
    %23 = vector.broadcast %cst_17 : f32 to vector<8x512xf32>
    %24 = arith.mulf %16, %23 : vector<8x512xf32>
    %25 = arith.subf %22, %24 : vector<8x512xf32>
    %cst_18 = arith.constant 1.000000e+00 : f32
    %26 = vector.broadcast %cst_18 : f32 to vector<8x512xf32>
    %27 = arith.cmpf ogt, %25, %26 : vector<8x512xf32>
    %28 = arith.extui %27 : vector<8x512xi1> to vector<8x512xi32>
    %29 = arith.sitofp %28 : vector<8x512xi32> to vector<8x512xf32>
    %30 = arith.truncf %29 : vector<8x512xf32> to vector<8x512xbf16>
    %31 = arith.index_cast %c0_i32_12 : i32 to index
    %c0_19 = arith.constant 0 : index
    %c0_20 = arith.constant 0 : index
    %32 = vector.load %arg7[%31, %c0_19, %c0_20] : memref<8x8x512xbf16, #tpu.memory_space<vmem>>, vector<1x8x512xbf16>
    %33 = vector.shape_cast %32 : vector<1x8x512xbf16> to vector<8x512xbf16>
    %34 = vector.shape_cast %30 : vector<8x512xbf16> to vector<1x8x512xbf16>
    tpu.vector_store %arg7[%31, %c0_19, %c0_20], %34 {strides = array<i32>} : memref<8x8x512xbf16, #tpu.memory_space<vmem>>, vector<1x8x512xbf16>,
    %35 = arith.index_cast %c0_i32_12 : i32 to index
    %c0_21 = arith.constant 0 : index
    %c0_22 = arith.constant 0 : index
    %36 = vector.load %arg8[%35, %c0_21, %c0_22] : memref<8x8x512xf32, #tpu.memory_space<vmem>>, vector<1x8x512xf32>
    %37 = vector.shape_cast %36 : vector<1x8x512xf32> to vector<8x512xf32>
    %38 = vector.shape_cast %25 : vector<8x512xf32> to vector<1x8x512xf32>
    tpu.vector_store %arg8[%35, %c0_21, %c0_22], %38 {strides = array<i32>} : memref<8x8x512xf32, #tpu.memory_space<vmem>>, vector<1x8x512xf32>,
    %c1_i32 = arith.constant 1 : i32
    %cst_23 = arith.constant 1.000000e+00 : f32
    %39 = vector.broadcast %cst_23 : f32 to vector<8x512xf32>
    %40 = arith.cmpf ogt, %25, %39 : vector<8x512xf32>
    %41 = arith.extui %40 : vector<8x512xi1> to vector<8x512xi32>
    %42 = arith.sitofp %41 : vector<8x512xi32> to vector<8x512xf32>
    %cst_24 = arith.constant 0.879999995 : f32
    %43 = vector.broadcast %cst_24 : f32 to vector<8x512xf32>
    %44 = arith.mulf %43, %25 : vector<8x512xf32>
    %45 = arith.index_cast %c1_i32 : i32 to index
    %c0_25 = arith.constant 0 : index
    %c0_26 = arith.constant 0 : index
    %46 = vector.load %arg11[%45, %c0_25, %c0_26] : memref<8x8x512xf32, #tpu.memory_space<vmem>>, vector<1x8x512xf32>
    %47 = vector.shape_cast %46 : vector<1x8x512xf32> to vector<8x512xf32>
    %48 = arith.addf %44, %47 : vector<8x512xf32>
    %cst_27 = arith.constant 1.000000e+00 : f32
    %49 = vector.broadcast %cst_27 : f32 to vector<8x512xf32>
    %50 = arith.mulf %42, %49 : vector<8x512xf32>
    %51 = arith.subf %48, %50 : vector<8x512xf32>
    %cst_28 = arith.constant 1.000000e+00 : f32
    %52 = vector.broadcast %cst_28 : f32 to vector<8x512xf32>
    %53 = arith.cmpf ogt, %51, %52 : vector<8x512xf32>
    %54 = arith.extui %53 : vector<8x512xi1> to vector<8x512xi32>
    %55 = arith.sitofp %54 : vector<8x512xi32> to vector<8x512xf32>
    %56 = arith.truncf %55 : vector<8x512xf32> to vector<8x512xbf16>
    %57 = arith.index_cast %c1_i32 : i32 to index
    %c0_29 = arith.constant 0 : index
    %c0_30 = arith.constant 0 : index
    %58 = vector.load %arg7[%57, %c0_29, %c0_30] : memref<8x8x512xbf16, #tpu.memory_space<vmem>>, vector<1x8x512xbf16>
    %59 = vector.shape_cast %58 : vector<1x8x512xbf16> to vector<8x512xbf16>
    %60 = vector.shape_cast %56 : vector<8x512xbf16> to vector<1x8x512xbf16>
    tpu.vector_store %arg7[%57, %c0_29, %c0_30], %60 {strides = array<i32>} : memref<8x8x512xbf16, #tpu.memory_space<vmem>>, vector<1x8x512xbf16>,
    %61 = arith.index_cast %c1_i32 : i32 to index
    %c0_31 = arith.constant 0 : index
    %c0_32 = arith.constant 0 : index
    %62 = vector.load %arg8[%61, %c0_31, %c0_32] : memref<8x8x512xf32, #tpu.memory_space<vmem>>, vector<1x8x512xf32>
    %63 = vector.shape_cast %62 : vector<1x8x512xf32> to vector<8x512xf32>
    %64 = vector.shape_cast %51 : vector<8x512xf32> to vector<1x8x512xf32>
    tpu.vector_store %arg8[%61, %c0_31, %c0_32], %64 {strides = array<i32>} : memref<8x8x512xf32, #tpu.memory_space<vmem>>, vector<1x8x512xf32>,
    %c2_i32 = arith.constant 2 : i32
    %cst_33 = arith.constant 1.000000e+00 : f32
    %65 = vector.broadcast %cst_33 : f32 to vector<8x512xf32>
    %66 = arith.cmpf ogt, %51, %65 : vector<8x512xf32>
    %67 = arith.extui %66 : vector<8x512xi1> to vector<8x512xi32>
    %68 = arith.sitofp %67 : vector<8x512xi32> to vector<8x512xf32>
    %cst_34 = arith.constant 0.879999995 : f32
    %69 = vector.broadcast %cst_34 : f32 to vector<8x512xf32>
    %70 = arith.mulf %69, %51 : vector<8x512xf32>
    %71 = arith.index_cast %c2_i32 : i32 to index
    %c0_35 = arith.constant 0 : index
    %c0_36 = arith.constant 0 : index
    %72 = vector.load %arg11[%71, %c0_35, %c0_36] : memref<8x8x512xf32, #tpu.memory_space<vmem>>, vector<1x8x512xf32>
    %73 = vector.shape_cast %72 : vector<1x8x512xf32> to vector<8x512xf32>
    %74 = arith.addf %70, %73 : vector<8x512xf32>
    %cst_37 = arith.constant 1.000000e+00 : f32
    %75 = vector.broadcast %cst_37 : f32 to vector<8x512xf32>
    %76 = arith.mulf %68, %75 : vector<8x512xf32>
    %77 = arith.subf %74, %76 : vector<8x512xf32>
    %cst_38 = arith.constant 1.000000e+00 : f32
    %78 = vector.broadcast %cst_38 : f32 to vector<8x512xf32>
    %79 = arith.cmpf ogt, %77, %78 : vector<8x512xf32>
    %80 = arith.extui %79 : vector<8x512xi1> to vector<8x512xi32>
    %81 = arith.sitofp %80 : vector<8x512xi32> to vector<8x512xf32>
    %82 = arith.truncf %81 : vector<8x512xf32> to vector<8x512xbf16>
    %83 = arith.index_cast %c2_i32 : i32 to index
    %c0_39 = arith.constant 0 : index
    %c0_40 = arith.constant 0 : index
    %84 = vector.load %arg7[%83, %c0_39, %c0_40] : memref<8x8x512xbf16, #tpu.memory_space<vmem>>, vector<1x8x512xbf16>
    %85 = vector.shape_cast %84 : vector<1x8x512xbf16> to vector<8x512xbf16>
    %86 = vector.shape_cast %82 : vector<8x512xbf16> to vector<1x8x512xbf16>
    tpu.vector_store %arg7[%83, %c0_39, %c0_40], %86 {strides = array<i32>} : memref<8x8x512xbf16, #tpu.memory_space<vmem>>, vector<1x8x512xbf16>,
    %87 = arith.index_cast %c2_i32 : i32 to index
    %c0_41 = arith.constant 0 : index
    %c0_42 = arith.constant 0 : index
    %88 = vector.load %arg8[%87, %c0_41, %c0_42] : memref<8x8x512xf32, #tpu.memory_space<vmem>>, vector<1x8x512xf32>
    %89 = vector.shape_cast %88 : vector<1x8x512xf32> to vector<8x512xf32>
    %90 = vector.shape_cast %77 : vector<8x512xf32> to vector<1x8x512xf32>
    tpu.vector_store %arg8[%87, %c0_41, %c0_42], %90 {strides = array<i32>} : memref<8x8x512xf32, #tpu.memory_space<vmem>>, vector<1x8x512xf32>,
    %c3_i32 = arith.constant 3 : i32
    %cst_43 = arith.constant 1.000000e+00 : f32
    %91 = vector.broadcast %cst_43 : f32 to vector<8x512xf32>
    %92 = arith.cmpf ogt, %77, %91 : vector<8x512xf32>
    %93 = arith.extui %92 : vector<8x512xi1> to vector<8x512xi32>
    %94 = arith.sitofp %93 : vector<8x512xi32> to vector<8x512xf32>
    %cst_44 = arith.constant 0.879999995 : f32
    %95 = vector.broadcast %cst_44 : f32 to vector<8x512xf32>
    %96 = arith.mulf %95, %77 : vector<8x512xf32>
    %97 = arith.index_cast %c3_i32 : i32 to index
    %c0_45 = arith.constant 0 : index
    %c0_46 = arith.constant 0 : index
    %98 = vector.load %arg11[%97, %c0_45, %c0_46] : memref<8x8x512xf32, #tpu.memory_space<vmem>>, vector<1x8x512xf32>
    %99 = vector.shape_cast %98 : vector<1x8x512xf32> to vector<8x512xf32>
    %100 = arith.addf %96, %99 : vector<8x512xf32>
    %cst_47 = arith.constant 1.000000e+00 : f32
    %101 = vector.broadcast %cst_47 : f32 to vector<8x512xf32>
    %102 = arith.mulf %94, %101 : vector<8x512xf32>
    %103 = arith.subf %100, %102 : vector<8x512xf32>
    %cst_48 = arith.constant 1.000000e+00 : f32
    %104 = vector.broadcast %cst_48 : f32 to vector<8x512xf32>
    %105 = arith.cmpf ogt, %103, %104 : vector<8x512xf32>
    %106 = arith.extui %105 : vector<8x512xi1> to vector<8x512xi32>
    %107 = arith.sitofp %106 : vector<8x512xi32> to vector<8x512xf32>
    %108 = arith.truncf %107 : vector<8x512xf32> to vector<8x512xbf16>
    %109 = arith.index_cast %c3_i32 : i32 to index
    %c0_49 = arith.constant 0 : index
    %c0_50 = arith.constant 0 : index
    %110 = vector.load %arg7[%109, %c0_49, %c0_50] : memref<8x8x512xbf16, #tpu.memory_space<vmem>>, vector<1x8x512xbf16>
    %111 = vector.shape_cast %110 : vector<1x8x512xbf16> to vector<8x512xbf16>
    %112 = vector.shape_cast %108 : vector<8x512xbf16> to vector<1x8x512xbf16>
    tpu.vector_store %arg7[%109, %c0_49, %c0_50], %112 {strides = array<i32>} : memref<8x8x512xbf16, #tpu.memory_space<vmem>>, vector<1x8x512xbf16>,
    %113 = arith.index_cast %c3_i32 : i32 to index
    %c0_51 = arith.constant 0 : index
    %c0_52 = arith.constant 0 : index
    %114 = vector.load %arg8[%113, %c0_51, %c0_52] : memref<8x8x512xf32, #tpu.memory_space<vmem>>, vector<1x8x512xf32>
    %115 = vector.shape_cast %114 : vector<1x8x512xf32> to vector<8x512xf32>
    %116 = vector.shape_cast %103 : vector<8x512xf32> to vector<1x8x512xf32>
    tpu.vector_store %arg8[%113, %c0_51, %c0_52], %116 {strides = array<i32>} : memref<8x8x512xf32, #tpu.memory_space<vmem>>, vector<1x8x512xf32>,
    %c4_i32 = arith.constant 4 : i32
    %cst_53 = arith.constant 1.000000e+00 : f32
    %117 = vector.broadcast %cst_53 : f32 to vector<8x512xf32>
    %118 = arith.cmpf ogt, %103, %117 : vector<8x512xf32>
    %119 = arith.extui %118 : vector<8x512xi1> to vector<8x512xi32>
    %120 = arith.sitofp %119 : vector<8x512xi32> to vector<8x512xf32>
    %cst_54 = arith.constant 0.879999995 : f32
    %121 = vector.broadcast %cst_54 : f32 to vector<8x512xf32>
    %122 = arith.mulf %121, %103 : vector<8x512xf32>
    %123 = arith.index_cast %c4_i32 : i32 to index
    %c0_55 = arith.constant 0 : index
    %c0_56 = arith.constant 0 : index
    %124 = vector.load %arg11[%123, %c0_55, %c0_56] : memref<8x8x512xf32, #tpu.memory_space<vmem>>, vector<1x8x512xf32>
    %125 = vector.shape_cast %124 : vector<1x8x512xf32> to vector<8x512xf32>
    %126 = arith.addf %122, %125 : vector<8x512xf32>
    %cst_57 = arith.constant 1.000000e+00 : f32
    %127 = vector.broadcast %cst_57 : f32 to vector<8x512xf32>
    %128 = arith.mulf %120, %127 : vector<8x512xf32>
    %129 = arith.subf %126, %128 : vector<8x512xf32>
    %cst_58 = arith.constant 1.000000e+00 : f32
    %130 = vector.broadcast %cst_58 : f32 to vector<8x512xf32>
    %131 = arith.cmpf ogt, %129, %130 : vector<8x512xf32>
    %132 = arith.extui %131 : vector<8x512xi1> to vector<8x512xi32>
    %133 = arith.sitofp %132 : vector<8x512xi32> to vector<8x512xf32>
    %134 = arith.truncf %133 : vector<8x512xf32> to vector<8x512xbf16>
    %135 = arith.index_cast %c4_i32 : i32 to index
    %c0_59 = arith.constant 0 : index
    %c0_60 = arith.constant 0 : index
    %136 = vector.load %arg7[%135, %c0_59, %c0_60] : memref<8x8x512xbf16, #tpu.memory_space<vmem>>, vector<1x8x512xbf16>
    %137 = vector.shape_cast %136 : vector<1x8x512xbf16> to vector<8x512xbf16>
    %138 = vector.shape_cast %134 : vector<8x512xbf16> to vector<1x8x512xbf16>
    tpu.vector_store %arg7[%135, %c0_59, %c0_60], %138 {strides = array<i32>} : memref<8x8x512xbf16, #tpu.memory_space<vmem>>, vector<1x8x512xbf16>,
    %139 = arith.index_cast %c4_i32 : i32 to index
    %c0_61 = arith.constant 0 : index
    %c0_62 = arith.constant 0 : index
    %140 = vector.load %arg8[%139, %c0_61, %c0_62] : memref<8x8x512xf32, #tpu.memory_space<vmem>>, vector<1x8x512xf32>
    %141 = vector.shape_cast %140 : vector<1x8x512xf32> to vector<8x512xf32>
    %142 = vector.shape_cast %129 : vector<8x512xf32> to vector<1x8x512xf32>
    tpu.vector_store %arg8[%139, %c0_61, %c0_62], %142 {strides = array<i32>} : memref<8x8x512xf32, #tpu.memory_space<vmem>>, vector<1x8x512xf32>,
    %c5_i32 = arith.constant 5 : i32
    %cst_63 = arith.constant 1.000000e+00 : f32
    %143 = vector.broadcast %cst_63 : f32 to vector<8x512xf32>
    %144 = arith.cmpf ogt, %129, %143 : vector<8x512xf32>
    %145 = arith.extui %144 : vector<8x512xi1> to vector<8x512xi32>
    %146 = arith.sitofp %145 : vector<8x512xi32> to vector<8x512xf32>
    %cst_64 = arith.constant 0.879999995 : f32
    %147 = vector.broadcast %cst_64 : f32 to vector<8x512xf32>
    %148 = arith.mulf %147, %129 : vector<8x512xf32>
    %149 = arith.index_cast %c5_i32 : i32 to index
    %c0_65 = arith.constant 0 : index
    %c0_66 = arith.constant 0 : index
    %150 = vector.load %arg11[%149, %c0_65, %c0_66] : memref<8x8x512xf32, #tpu.memory_space<vmem>>, vector<1x8x512xf32>
    %151 = vector.shape_cast %150 : vector<1x8x512xf32> to vector<8x512xf32>
    %152 = arith.addf %148, %151 : vector<8x512xf32>
    %cst_67 = arith.constant 1.000000e+00 : f32
    %153 = vector.broadcast %cst_67 : f32 to vector<8x512xf32>
    %154 = arith.mulf %146, %153 : vector<8x512xf32>
    %155 = arith.subf %152, %154 : vector<8x512xf32>
    %cst_68 = arith.constant 1.000000e+00 : f32
    %156 = vector.broadcast %cst_68 : f32 to vector<8x512xf32>
    %157 = arith.cmpf ogt, %155, %156 : vector<8x512xf32>
    %158 = arith.extui %157 : vector<8x512xi1> to vector<8x512xi32>
    %159 = arith.sitofp %158 : vector<8x512xi32> to vector<8x512xf32>
    %160 = arith.truncf %159 : vector<8x512xf32> to vector<8x512xbf16>
    %161 = arith.index_cast %c5_i32 : i32 to index
    %c0_69 = arith.constant 0 : index
    %c0_70 = arith.constant 0 : index
    %162 = vector.load %arg7[%161, %c0_69, %c0_70] : memref<8x8x512xbf16, #tpu.memory_space<vmem>>, vector<1x8x512xbf16>
    %163 = vector.shape_cast %162 : vector<1x8x512xbf16> to vector<8x512xbf16>
    %164 = vector.shape_cast %160 : vector<8x512xbf16> to vector<1x8x512xbf16>
    tpu.vector_store %arg7[%161, %c0_69, %c0_70], %164 {strides = array<i32>} : memref<8x8x512xbf16, #tpu.memory_space<vmem>>, vector<1x8x512xbf16>,
    %165 = arith.index_cast %c5_i32 : i32 to index
    %c0_71 = arith.constant 0 : index
    %c0_72 = arith.constant 0 : index
    %166 = vector.load %arg8[%165, %c0_71, %c0_72] : memref<8x8x512xf32, #tpu.memory_space<vmem>>, vector<1x8x512xf32>
    %167 = vector.shape_cast %166 : vector<1x8x512xf32> to vector<8x512xf32>
    %168 = vector.shape_cast %155 : vector<8x512xf32> to vector<1x8x512xf32>
    tpu.vector_store %arg8[%165, %c0_71, %c0_72], %168 {strides = array<i32>} : memref<8x8x512xf32, #tpu.memory_space<vmem>>, vector<1x8x512xf32>,
    %c6_i32 = arith.constant 6 : i32
    %cst_73 = arith.constant 1.000000e+00 : f32
    %169 = vector.broadcast %cst_73 : f32 to vector<8x512xf32>
    %170 = arith.cmpf ogt, %155, %169 : vector<8x512xf32>
    %171 = arith.extui %170 : vector<8x512xi1> to vector<8x512xi32>
    %172 = arith.sitofp %171 : vector<8x512xi32> to vector<8x512xf32>
    %cst_74 = arith.constant 0.879999995 : f32
    %173 = vector.broadcast %cst_74 : f32 to vector<8x512xf32>
    %174 = arith.mulf %173, %155 : vector<8x512xf32>
    %175 = arith.index_cast %c6_i32 : i32 to index
    %c0_75 = arith.constant 0 : index
    %c0_76 = arith.constant 0 : index
    %176 = vector.load %arg11[%175, %c0_75, %c0_76] : memref<8x8x512xf32, #tpu.memory_space<vmem>>, vector<1x8x512xf32>
    %177 = vector.shape_cast %176 : vector<1x8x512xf32> to vector<8x512xf32>
    %178 = arith.addf %174, %177 : vector<8x512xf32>
    %cst_77 = arith.constant 1.000000e+00 : f32
    %179 = vector.broadcast %cst_77 : f32 to vector<8x512xf32>
    %180 = arith.mulf %172, %179 : vector<8x512xf32>
    %181 = arith.subf %178, %180 : vector<8x512xf32>
    %cst_78 = arith.constant 1.000000e+00 : f32
    %182 = vector.broadcast %cst_78 : f32 to vector<8x512xf32>
    %183 = arith.cmpf ogt, %181, %182 : vector<8x512xf32>
    %184 = arith.extui %183 : vector<8x512xi1> to vector<8x512xi32>
    %185 = arith.sitofp %184 : vector<8x512xi32> to vector<8x512xf32>
    %186 = arith.truncf %185 : vector<8x512xf32> to vector<8x512xbf16>
    %187 = arith.index_cast %c6_i32 : i32 to index
    %c0_79 = arith.constant 0 : index
    %c0_80 = arith.constant 0 : index
    %188 = vector.load %arg7[%187, %c0_79, %c0_80] : memref<8x8x512xbf16, #tpu.memory_space<vmem>>, vector<1x8x512xbf16>
    %189 = vector.shape_cast %188 : vector<1x8x512xbf16> to vector<8x512xbf16>
    %190 = vector.shape_cast %186 : vector<8x512xbf16> to vector<1x8x512xbf16>
    tpu.vector_store %arg7[%187, %c0_79, %c0_80], %190 {strides = array<i32>} : memref<8x8x512xbf16, #tpu.memory_space<vmem>>, vector<1x8x512xbf16>,
    %191 = arith.index_cast %c6_i32 : i32 to index
    %c0_81 = arith.constant 0 : index
    %c0_82 = arith.constant 0 : index
    %192 = vector.load %arg8[%191, %c0_81, %c0_82] : memref<8x8x512xf32, #tpu.memory_space<vmem>>, vector<1x8x512xf32>
    %193 = vector.shape_cast %192 : vector<1x8x512xf32> to vector<8x512xf32>
    %194 = vector.shape_cast %181 : vector<8x512xf32> to vector<1x8x512xf32>
    tpu.vector_store %arg8[%191, %c0_81, %c0_82], %194 {strides = array<i32>} : memref<8x8x512xf32, #tpu.memory_space<vmem>>, vector<1x8x512xf32>,
    %c7_i32 = arith.constant 7 : i32
    %cst_83 = arith.constant 1.000000e+00 : f32
    %195 = vector.broadcast %cst_83 : f32 to vector<8x512xf32>
    %196 = arith.cmpf ogt, %181, %195 : vector<8x512xf32>
    %197 = arith.extui %196 : vector<8x512xi1> to vector<8x512xi32>
    %198 = arith.sitofp %197 : vector<8x512xi32> to vector<8x512xf32>
    %cst_84 = arith.constant 0.879999995 : f32
    %199 = vector.broadcast %cst_84 : f32 to vector<8x512xf32>
    %200 = arith.mulf %199, %181 : vector<8x512xf32>
    %201 = arith.index_cast %c7_i32 : i32 to index
    %c0_85 = arith.constant 0 : index
    %c0_86 = arith.constant 0 : index
    %202 = vector.load %arg11[%201, %c0_85, %c0_86] : memref<8x8x512xf32, #tpu.memory_space<vmem>>, vector<1x8x512xf32>
    %203 = vector.shape_cast %202 : vector<1x8x512xf32> to vector<8x512xf32>
    %204 = arith.addf %200, %203 : vector<8x512xf32>
    %cst_87 = arith.constant 1.000000e+00 : f32
    %205 = vector.broadcast %cst_87 : f32 to vector<8x512xf32>
    %206 = arith.mulf %198, %205 : vector<8x512xf32>
    %207 = arith.subf %204, %206 : vector<8x512xf32>
    %cst_88 = arith.constant 1.000000e+00 : f32
    %208 = vector.broadcast %cst_88 : f32 to vector<8x512xf32>
    %209 = arith.cmpf ogt, %207, %208 : vector<8x512xf32>
    %210 = arith.extui %209 : vector<8x512xi1> to vector<8x512xi32>
    %211 = arith.sitofp %210 : vector<8x512xi32> to vector<8x512xf32>
    %212 = arith.truncf %211 : vector<8x512xf32> to vector<8x512xbf16>
    %213 = arith.index_cast %c7_i32 : i32 to index
    %c0_89 = arith.constant 0 : index
    %c0_90 = arith.constant 0 : index
    %214 = vector.load %arg7[%213, %c0_89, %c0_90] : memref<8x8x512xbf16, #tpu.memory_space<vmem>>, vector<1x8x512xbf16>
    %215 = vector.shape_cast %214 : vector<1x8x512xbf16> to vector<8x512xbf16>
    %216 = vector.shape_cast %212 : vector<8x512xbf16> to vector<1x8x512xbf16>
    tpu.vector_store %arg7[%213, %c0_89, %c0_90], %216 {strides = array<i32>} : memref<8x8x512xbf16, #tpu.memory_space<vmem>>, vector<1x8x512xbf16>,
    %217 = arith.index_cast %c7_i32 : i32 to index
    %c0_91 = arith.constant 0 : index
    %c0_92 = arith.constant 0 : index
    %218 = vector.load %arg8[%217, %c0_91, %c0_92] : memref<8x8x512xf32, #tpu.memory_space<vmem>>, vector<1x8x512xf32>
    %219 = vector.shape_cast %218 : vector<1x8x512xf32> to vector<8x512xf32>
    %220 = vector.shape_cast %207 : vector<8x512xf32> to vector<1x8x512xf32>
    tpu.vector_store %arg8[%217, %c0_91, %c0_92], %220 {strides = array<i32>} : memref<8x8x512xf32, #tpu.memory_space<vmem>>, vector<1x8x512xf32>,
    %c8_i32 = arith.constant 8 : i32
    %c0_93 = arith.constant 0 : index
    %c0_94 = arith.constant 0 : index
    %221 = vector.load %arg10[%c0_93, %c0_94] : memref<8x512xf32, #tpu.memory_space<vmem>>, vector<8x512xf32>
    tpu.vector_store %arg10[%c0_93, %c0_94], %207 {strides = array<i32>} : memref<8x512xf32, #tpu.memory_space<vmem>>, vector<8x512xf32>,
    %c0_95 = arith.constant 0 : index
    %c0_96 = arith.constant 0 : index
    %c0_97 = arith.constant 0 : index
    %222 = vector.load %arg7[%c0_95, %c0_96, %c0_97] : memref<8x8x512xbf16, #tpu.memory_space<vmem>>, vector<8x8x512xbf16>
    %223 = vector.shape_cast %222 : vector<8x8x512xbf16> to vector<64x512xbf16>
    %c0_98 = arith.constant 0 : index
    %c0_99 = arith.constant 0 : index
    %224 = vector.load %arg5[%c0_98, %c0_99] : memref<512x128xbf16, #tpu.memory_space<vmem>>, vector<512x128xbf16>
    %cst_100 = arith.constant dense<0.000000e+00> : vector<64x128xf32>
    %225 = tpu.matmul %223, %224, %cst_100 {dimension_numbers = #tpu.dot_dimension_numbers<[1], [0], [0], [1], [0, 0, 1, 1], [], []>} : vector<64x512xbf16>, vector<512x128xbf16>, vector<64x128xf32> -> vector<64x128xf32>
    %c0_101 = arith.constant 0 : index
    %c0_102 = arith.constant 0 : index
    %226 = vector.load %arg6[%c0_101, %c0_102] : memref<1x128xf32, #tpu.memory_space<vmem>>, vector<1x128xf32>
    %227 = vector.broadcast %226 : vector<1x128xf32> to vector<64x128xf32>
    %228 = arith.addf %225, %227 : vector<64x128xf32>
    %229 = vector.shape_cast %228 : vector<64x128xf32> to vector<8x8x128xf32>
    %c0_103 = arith.constant 0 : index
    %c0_104 = arith.constant 0 : index
    %c0_105 = arith.constant 0 : index
    %230 = vector.load %arg9[%c0_103, %c0_104, %c0_105] : memref<8x8x128xf32, #tpu.memory_space<vmem>>, vector<8x8x128xf32>
    tpu.vector_store %arg9[%c0_103, %c0_104, %c0_105], %229 {strides = array<i32>} : memref<8x8x128xf32, #tpu.memory_space<vmem>>, vector<8x8x128xf32>,
    return
  }
  func.func @transform_0(%arg0: i32) -> (i32, i32, i32) {
    %c0_i32 = arith.constant 0 : i32
    %c0_i32_0 = arith.constant 0 : i32
    %c0_i32_1 = arith.constant 0 : i32
    return %arg0, %c0_i32, %c0_i32_0 : i32, i32, i32
  }
  func.func @transform_1(%arg0: i32) -> (i32, i32) {
    %c0_i32 = arith.constant 0 : i32
    %c0_i32_0 = arith.constant 0 : i32
    %c0_i32_1 = arith.constant 0 : i32
    return %c0_i32, %c0_i32_0 : i32, i32
  }
  func.func @transform_2(%arg0: i32) -> (i32, i32) {
    %c0_i32 = arith.constant 0 : i32
    %c0_i32_0 = arith.constant 0 : i32
    %c0_i32_1 = arith.constant 0 : i32
    return %c0_i32, %c0_i32_0 : i32, i32
  }
  func.func @transform_3(%arg0: i32) -> (i32, i32) {
    %c0_i32 = arith.constant 0 : i32
    %c0_i32_0 = arith.constant 0 : i32
    %c0_i32_1 = arith.constant 0 : i32
    return %c0_i32, %c0_i32_0 : i32, i32
  }
  func.func @transform_4(%arg0: i32) -> (i32, i32) {
    %c0_i32 = arith.constant 0 : i32
    %c0_i32_0 = arith.constant 0 : i32
    %c0_i32_1 = arith.constant 0 : i32
    return %c0_i32, %c0_i32_0 : i32, i32
  }
  func.func @transform_5(%arg0: i32) -> (i32, i32) {
    %c0_i32 = arith.constant 0 : i32
    %c0_i32_0 = arith.constant 0 : i32
    %c0_i32_1 = arith.constant 0 : i32
    return %c0_i32, %c0_i32_0 : i32, i32
  }
  func.func @transform_6(%arg0: i32) -> (i32, i32, i32) {
    %c0_i32 = arith.constant 0 : i32
    %c0_i32_0 = arith.constant 0 : i32
    %c0_i32_1 = arith.constant 0 : i32
    return %arg0, %c0_i32, %c0_i32_0 : i32, i32, i32
  }
  func.func @transform_7(%arg0: i32) -> (i32, i32, i32) {
    %c0_i32 = arith.constant 0 : i32
    %c0_i32_0 = arith.constant 0 : i32
    %c0_i32_1 = arith.constant 0 : i32
    return %arg0, %c0_i32, %c0_i32_0 : i32, i32, i32
  }
  func.func @transform_8(%arg0: i32) -> (i32, i32, i32) {
    %c0_i32 = arith.constant 0 : i32
    %c0_i32_0 = arith.constant 0 : i32
    %c0_i32_1 = arith.constant 0 : i32
    return %arg0, %c0_i32, %c0_i32_0 : i32, i32, i32
  }
}

</mosaic_0001>

<llo_original>
// kernel: tpu_custom_call.1
$region0: #{tpu_custom_call.1}
  #allocation0 [shape = 'u32[]', space=smem, size = 0x4, offset = 0x4, fixed_abs, tag = 'smem constant byte address 0x4 - core index']
  #allocation1 [shape = 'u32[144,128]{1,0:T(1,128)}', space=vmem, size = 0x12000, scoped, tag = 'internal scratch']
  #allocation2 [shape = 'f32[8,512]{1,0:T(8,128)}', space=vmem, size = 0x4000, scoped, tag = 'scratch operand']
  #allocation3 [shape = 'f32[8,8,512]{2,1,0:T(8,128)}', space=vmem, size = 0x20000, scoped, tag = 'scratch operand']
  %s0 = inlined_call_operand.hbm [shape: bf16[8,8,512], index: 0, kind: input, shape index: {}]
  %s1 = inlined_call_operand.hbm [shape: f32[8,512], index: 1, kind: input, shape index: {}]
  %s2 = inlined_call_operand.hbm [shape: bf16[512,512], index: 2, kind: input, shape index: {}]
  %s3 = inlined_call_operand.vmem [shape: f32[1,512], index: 3, kind: input, shape index: {}]
  %s4 = inlined_call_operand.hbm [shape: bf16[512,128], index: 4, kind: input, shape index: {}]
  %s5 = inlined_call_operand.vmem [shape: f32[1,128], index: 5, kind: input, shape index: {}]
  %s6 = inlined_call_operand.hbm [shape: bf16[8,8,512], index: 6, kind: output, shape index: {0}]
  %s7 = inlined_call_operand.hbm [shape: f32[8,8,512], index: 7, kind: output, shape index: {1}]
  %s8 = inlined_call_operand.hbm [shape: f32[8,8,128], index: 8, kind: output, shape index: {2}]
  %9 = xla_tuple %s6, %s7, %s8
  %s10 = sld [smem:[#allocation0]]
  $region70: #{tpu_custom_call.1} parent=0
    _
  %s12 = ssub.s32 1, %s10
  %s13 = scalar_select 0, %s12, %s10
  $region1: #{tpu_custom_call.1} parent=0
    #allocation4 [shape = 'u8[65536]{0}', space=vmem, size = 0x10000, scoped, tag = 'input window, operand 0, single buffered']
    #allocation5 [shape = 's32[1]{0}', space=sflag, size = 0x4, scoped, tag = 'scoped memory for tpu_custom_call.1']
    #allocation6 [shape = 's32[1]{0}', space=sflag, size = 0x4, scoped, tag = 'scoped memory for tpu_custom_call.1']
    #allocation7 [shape = 'u8[16384]{0}', space=vmem, size = 0x4000, scoped, tag = 'input window, operand 1, single buffered']
    #allocation8 [shape = 's32[1]{0}', space=sflag, size = 0x4, scoped, tag = 'scoped memory for tpu_custom_call.1']
    #allocation9 [shape = 'u8[524288]{0}', space=vmem, size = 0x80000, scoped, tag = 'input window, operand 2, single buffered']
    #allocation10 [shape = 'u8[131072]{0}', space=vmem, size = 0x20000, scoped, tag = 'input window, operand 4, single buffered']
    #allocation11 [shape = 's32[1]{0}', space=sflag, size = 0x4, scoped, tag = 'scoped memory for tpu_custom_call.1']
    #allocation12 [shape = 'u8[65536]{0}', space=vmem, size = 0x10000, scoped, tag = 'output window, operand 0, single buffered']
    #allocation13 [shape = 'u8[131072]{0}', space=vmem, size = 0x20000, scoped, tag = 'output window, operand 1, single buffered']
    #allocation14 [shape = 's32[1]{0}', space=sflag, size = 0x4, scoped, tag = 'scoped memory for tpu_custom_call.1']
    #allocation15 [shape = 'u8[32768]{0}', space=vmem, size = 0x8000, scoped, tag = 'output window, operand 2, single buffered']
    %14 = vsyncpa [#allocation5], 0
    %15 = vsyncpa [#allocation8], 0
    %16 = vsyncpa [#allocation11], 0
    %17 = vsyncpa [#allocation6], 0
    %18 = vsyncpa [#allocation14], 0
    // Predicated region
    $region2: #{tpu_custom_call.1} parent=1 // pred_check
      _
    $region3: #{tpu_custom_call.1} parent=1 // pred_check_branch
      %20 = sbr.rel (0) target = $region5
    $region4: #{tpu_custom_call.1} parent=1 // pred_region
      %s22 = ssub.s32 2048, 2048
      %23 = vsyncadd [#allocation5], %s22
      %s24 = sshll.u32 [#allocation4], 4
      %s25 = int_to_ptr.vmem [resolvable:$true] %s24
      %30 = dma.hbm_to_vmem [thread:$0]  %s0, 2048, %s25, [#allocation5], 256, 256, 16
    $region5: #{tpu_custom_call.1} parent=1 // pred_fallthru
      _
    // Predicated region
    $region6: #{tpu_custom_call.1} parent=1 // pred_check
      _
    $region7: #{tpu_custom_call.1} parent=1 // pred_check_branch
      %32 = sbr.rel (0) target = $region9
    $region8: #{tpu_custom_call.1} parent=1 // pred_region
      %s34 = ssub.s32 512, 512
      %35 = vsyncadd [#allocation8], %s34
      %s37 = sshll.u32 [#allocation7], 4
      %s38 = int_to_ptr.vmem [resolvable:$true] %s37
      %40 = dma.hbm_to_vmem [thread:$0]  %s1, 512, %s38, [#allocation8]
    $region9: #{tpu_custom_call.1} parent=1 // pred_fallthru
      _
    // Predicated region
    $region10: #{tpu_custom_call.1} parent=1 // pred_check
      _
    $region11: #{tpu_custom_call.1} parent=1 // pred_check_branch
      %42 = sbr.rel (0) target = $region13
    $region12: #{tpu_custom_call.1} parent=1 // pred_region
      %s44 = ssub.s32 16384, 16384
      %45 = vsyncadd [#allocation8], %s44
      %s46 = sshll.u32 [#allocation9], 4
      %s47 = int_to_ptr.vmem [resolvable:$true] %s46
      %52 = dma.hbm_to_vmem [thread:$0]  %s2, 16384, %s47, [#allocation8], 256, 256, 16
    $region13: #{tpu_custom_call.1} parent=1 // pred_fallthru
      _
    // Predicated region
    $region14: #{tpu_custom_call.1} parent=1 // pred_check
      _
    $region15: #{tpu_custom_call.1} parent=1 // pred_check_branch
      %54 = sbr.rel (0) target = $region17
    $region16: #{tpu_custom_call.1} parent=1 // pred_region
      _
    $region17: #{tpu_custom_call.1} parent=1 // pred_fallthru
      _
    // Predicated region
    $region18: #{tpu_custom_call.1} parent=1 // pred_check
      _
    $region19: #{tpu_custom_call.1} parent=1 // pred_check_branch
      %56 = sbr.rel (0) target = $region21
    $region20: #{tpu_custom_call.1} parent=1 // pred_region
      %s58 = ssub.s32 4096, 4096
      %59 = vsyncadd [#allocation11], %s58
      %s60 = sshll.u32 [#allocation10], 4
      %s61 = int_to_ptr.vmem [resolvable:$true] %s60
      %66 = dma.hbm_to_vmem [thread:$0]  %s4, 4096, %s61, [#allocation11], 64, 64, 4
    $region21: #{tpu_custom_call.1} parent=1 // pred_fallthru
      _
    // Predicated region
    $region22: #{tpu_custom_call.1} parent=1 // pred_check
      _
    $region23: #{tpu_custom_call.1} parent=1 // pred_check_branch
      %68 = sbr.rel (0) target = $region25
    $region24: #{tpu_custom_call.1} parent=1 // pred_region
      _
    $region25: #{tpu_custom_call.1} parent=1 // pred_fallthru
      _
    // Predicated region
    $region26: #{tpu_custom_call.1} parent=1 // pred_check
      _
    $region27: #{tpu_custom_call.1} parent=1 // pred_check_branch
      %70 = sbr.rel (0) target = $region29
    $region28: #{tpu_custom_call.1} parent=1 // pred_region
      %71 = dma.done [#allocation5], 2048
    $region29: #{tpu_custom_call.1} parent=1 // pred_fallthru
      _
    // Predicated region
    $region30: #{tpu_custom_call.1} parent=1 // pred_check
      _
    $region31: #{tpu_custom_call.1} parent=1 // pred_check_branch
      %73 = sbr.rel (0) target = $region33
    $region32: #{tpu_custom_call.1} parent=1 // pred_region
      %74 = dma.done [#allocation8], 512
    $region33: #{tpu_custom_call.1} parent=1 // pred_fallthru
      _
    // Predicated region
    $region34: #{tpu_custom_call.1} parent=1 // pred_check
      _
    $region35: #{tpu_custom_call.1} parent=1 // pred_check_branch
      %76 = sbr.rel (0) target = $region37
    $region36: #{tpu_custom_call.1} parent=1 // pred_region
      %77 = dma.done [#allocation8], 16384
    $region37: #{tpu_custom_call.1} parent=1 // pred_fallthru
      _
    // Predicated region
    $region38: #{tpu_custom_call.1} parent=1 // pred_check
      _
    $region39: #{tpu_custom_call.1} parent=1 // pred_check_branch
      %79 = sbr.rel (0) target = $region41
    $region40: #{tpu_custom_call.1} parent=1 // pred_region
      %80 = dma.done [#allocation11], 4096
    $region41: #{tpu_custom_call.1} parent=1 // pred_fallthru
      _
    %p82 = scmp.eq.s32.totalorder 0, 0
    // Predicated region
    $region42: #{tpu_custom_call.1} parent=1 // pred_check
      %p83 = pneg %p82
    $region43: #{tpu_custom_call.1} parent=1 // pred_check_branch
      %85 = sbr.rel (%p83) target = $region45
    $region44: #{tpu_custom_call.1} parent=1 // pred_region
      %v86 = vld [vmem:[#allocation7] sm:$0xff]
      %v87 = vld [vmem:[#allocation7 + $0x8] sm:$0xff]
      %v88 = vld [vmem:[#allocation7 + $0x10] sm:$0xff]
      %v89 = vld [vmem:[#allocation7 + $0x18] sm:$0xff]
      %90 = vst [vmem:[#allocation2] sm:$0xff] %v86
      %91 = vst [vmem:[#allocation2 + $0x8] sm:$0xff] %v87
      %92 = vst [vmem:[#allocation2 + $0x10] sm:$0xff] %v88
      %93 = vst [vmem:[#allocation2 + $0x18] sm:$0xff] %v89
    $region45: #{tpu_custom_call.1} parent=1 // pred_fallthru
      _
    %v94 = vld [vmem:[#allocation4] sm:$0xff]
    %v95 = vld [vmem:[#allocation4 + $0x8] sm:$0xff]
    %v96 = vld [vmem:[#allocation4 + $0x10] sm:$0xff]
    %v97 = vld [vmem:[#allocation4 + $0x18] sm:$0xff]
    %v98 = vld [vmem:[#allocation4 + $0x20] sm:$0xff]
    %v99 = vld [vmem:[#allocation4 + $0x28] sm:$0xff]
    %v100 = vld [vmem:[#allocation4 + $0x30] sm:$0xff]
    %v101 = vld [vmem:[#allocation4 + $0x38] sm:$0xff]
    %v102 = vld [vmem:[#allocation4 + $0x40] sm:$0xff]
    %v103 = vld [vmem:[#allocation4 + $0x48] sm:$0xff]
    %v104 = vld [vmem:[#allocation4 + $0x50] sm:$0xff]
    %v105 = vld [vmem:[#allocation4 + $0x58] sm:$0xff]
    %v106 = vld [vmem:[#allocation4 + $0x60] sm:$0xff]
    %v107 = vld [vmem:[#allocation4 + $0x68] sm:$0xff]
    %v108 = vld [vmem:[#allocation4 + $0x70] sm:$0xff]
    %v109 = vld [vmem:[#allocation4 + $0x78] sm:$0xff]
    %v110 = vld [vmem:[#allocation9] sm:$0xff]
    %v111 = vld [vmem:[#allocation9 + $0x8] sm:$0xff]
    %v112 = vld [vmem:[#allocation9 + $0x10] sm:$0xff]
    %v113 = vld [vmem:[#allocation9 + $0x18] sm:$0xff]
    %v114 = vld [vmem:[#allocation9 + $0x20] sm:$0xff]
    %v115 = vld [vmem:[#allocation9 + $0x28] sm:$0xff]
    %v116 = vld [vmem:[#allocation9 + $0x30] sm:$0xff]
    %v117 = vld [vmem:[#allocation9 + $0x38] sm:$0xff]
    %v118 = vld [vmem:[#allocation9 + $0x40] sm:$0xff]
    %v119 = vld [vmem:[#allocation9 + $0x48] sm:$0xff]
    %v120 = vld [vmem:[#allocation9 + $0x50] sm:$0xff]
    %v121 = vld [vmem:[#allocation9 + $0x58] sm:$0xff]
    %v122 = vld [vmem:[#allocation9 + $0x60] sm:$0xff]
    %v123 = vld [vmem:[#allocation9 + $0x68] sm:$0xff]
    %v124 = vld [vmem:[#allocation9 + $0x70] sm:$0xff]
    %v125 = vld [vmem:[#allocation9 + $0x78] sm:$0xff]
    %v126 = vld [vmem:[#allocation9 + $0x80] sm:$0xff]
    %v127 = vld [vmem:[#allocation9 + $0x88] sm:$0xff]
    %v128 = vld [vmem:[#allocation9 + $0x90] sm:$0xff]
    %v129 = vld [vmem:[#allocation9 + $0x98] sm:$0xff]
    %v130 = vld [vmem:[#allocation9 + $0xa0] sm:$0xff]
    %v131 = vld [vmem:[#allocation9 + $0xa8] sm:$0xff]
    %v132 = vld [vmem:[#allocation9 + $0xb0] sm:$0xff]
    %v133 = vld [vmem:[#allocation9 + $0xb8] sm:$0xff]
    %v134 = vld [vmem:[#allocation9 + $0xc0] sm:$0xff]
    %v135 = vld [vmem:[#allocation9 + $0xc8] sm:$0xff]
    %v136 = vld [vmem:[#allocation9 + $0xd0] sm:$0xff]
    %v137 = vld [vmem:[#allocation9 + $0xd8] sm:$0xff]
    %v138 = vld [vmem:[#allocation9 + $0xe0] sm:$0xff]
    %v139 = vld [vmem:[#allocation9 + $0xe8] sm:$0xff]
    %v140 = vld [vmem:[#allocation9 + $0xf0] sm:$0xff]
    %v141 = vld [vmem:[#allocation9 + $0xf8] sm:$0xff]
    %v142 = vld [vmem:[#allocation9 + $0x100] sm:$0xff]
    %v143 = vld [vmem:[#allocation9 + $0x108] sm:$0xff]
    %v144 = vld [vmem:[#allocation9 + $0x110] sm:$0xff]
    %v145 = vld [vmem:[#allocation9 + $0x118] sm:$0xff]
    %v146 = vld [vmem:[#allocation9 + $0x120] sm:$0xff]
    %v147 = vld [vmem:[#allocation9 + $0x128] sm:$0xff]
    %v148 = vld [vmem:[#allocation9 + $0x130] sm:$0xff]
    %v149 = vld [vmem:[#allocation9 + $0x138] sm:$0xff]
    %v150 = vld [vmem:[#allocation9 + $0x140] sm:$0xff]
    %v151 = vld [vmem:[#allocation9 + $0x148] sm:$0xff]
    %v152 = vld [vmem:[#allocation9 + $0x150] sm:$0xff]
    %v153 = vld [vmem:[#allocation9 + $0x158] sm:$0xff]
    %v154 = vld [vmem:[#allocation9 + $0x160] sm:$0xff]
    %v155 = vld [vmem:[#allocation9 + $0x168] sm:$0xff]
    %v156 = vld [vmem:[#allocation9 + $0x170] sm:$0xff]
    %v157 = vld [vmem:[#allocation9 + $0x178] sm:$0xff]
    %v158 = vld [vmem:[#allocation9 + $0x180] sm:$0xff]
    %v159 = vld [vmem:[#allocation9 + $0x188] sm:$0xff]
    %v160 = vld [vmem:[#allocation9 + $0x190] sm:$0xff]
    %v161 = vld [vmem:[#allocation9 + $0x198] sm:$0xff]
    %v162 = vld [vmem:[#allocation9 + $0x1a0] sm:$0xff]
    %v163 = vld [vmem:[#allocation9 + $0x1a8] sm:$0xff]
    %v164 = vld [vmem:[#allocation9 + $0x1b0] sm:$0xff]
    %v165 = vld [vmem:[#allocation9 + $0x1b8] sm:$0xff]
    %v166 = vld [vmem:[#allocation9 + $0x1c0] sm:$0xff]
    %v167 = vld [vmem:[#allocation9 + $0x1c8] sm:$0xff]
    %v168 = vld [vmem:[#allocation9 + $0x1d0] sm:$0xff]
    %v169 = vld [vmem:[#allocation9 + $0x1d8] sm:$0xff]
    %v170 = vld [vmem:[#allocation9 + $0x1e0] sm:$0xff]
    %v171 = vld [vmem:[#allocation9 + $0x1e8] sm:$0xff]
    %v172 = vld [vmem:[#allocation9 + $0x1f0] sm:$0xff]
    %v173 = vld [vmem:[#allocation9 + $0x1f8] sm:$0xff]
    %v174 = vld [vmem:[#allocation9 + $0x200] sm:$0xff]
    %v175 = vld [vmem:[#allocation9 + $0x208] sm:$0xff]
    %v176 = vld [vmem:[#allocation9 + $0x210] sm:$0xff]
    %v177 = vld [vmem:[#allocation9 + $0x218] sm:$0xff]
    %v178 = vld [vmem:[#allocation9 + $0x220] sm:$0xff]
    %v179 = vld [vmem:[#allocation9 + $0x228] sm:$0xff]
    %v180 = vld [vmem:[#allocation9 + $0x230] sm:$0xff]
    %v181 = vld [vmem:[#allocation9 + $0x238] sm:$0xff]
    %v182 = vld [vmem:[#allocation9 + $0x240] sm:$0xff]
    %v183 = vld [vmem:[#allocation9 + $0x248] sm:$0xff]
    %v184 = vld [vmem:[#allocation9 + $0x250] sm:$0xff]
    %v185 = vld [vmem:[#allocation9 + $0x258] sm:$0xff]
    %v186 = vld [vmem:[#allocation9 + $0x260] sm:$0xff]
    %v187 = vld [vmem:[#allocation9 + $0x268] sm:$0xff]
    %v188 = vld [vmem:[#allocation9 + $0x270] sm:$0xff]
    %v189 = vld [vmem:[#allocation9 + $0x278] sm:$0xff]
    %v190 = vld [vmem:[#allocation9 + $0x280] sm:$0xff]
    %v191 = vld [vmem:[#allocation9 + $0x288] sm:$0xff]
    %v192 = vld [vmem:[#allocation9 + $0x290] sm:$0xff]
    %v193 = vld [vmem:[#allocation9 + $0x298] sm:$0xff]
    %v194 = vld [vmem:[#allocation9 + $0x2a0] sm:$0xff]
    %v195 = vld [vmem:[#allocation9 + $0x2a8] sm:$0xff]
    %v196 = vld [vmem:[#allocation9 + $0x2b0] sm:$0xff]
    %v197 = vld [vmem:[#allocation9 + $0x2b8] sm:$0xff]
    %v198 = vld [vmem:[#allocation9 + $0x2c0] sm:$0xff]
    %v199 = vld [vmem:[#allocation9 + $0x2c8] sm:$0xff]
    %v200 = vld [vmem:[#allocation9 + $0x2d0] sm:$0xff]
    %v201 = vld [vmem:[#allocation9 + $0x2d8] sm:$0xff]
    %v202 = vld [vmem:[#allocation9 + $0x2e0] sm:$0xff]
    %v203 = vld [vmem:[#allocation9 + $0x2e8] sm:$0xff]
    %v204 = vld [vmem:[#allocation9 + $0x2f0] sm:$0xff]
    %v205 = vld [vmem:[#allocation9 + $0x2f8] sm:$0xff]
    %v206 = vld [vmem:[#allocation9 + $0x300] sm:$0xff]
    %v207 = vld [vmem:[#allocation9 + $0x308] sm:$0xff]
    %v208 = vld [vmem:[#allocation9 + $0x310] sm:$0xff]
    %v209 = vld [vmem:[#allocation9 + $0x318] sm:$0xff]
    %v210 = vld [vmem:[#allocation9 + $0x320] sm:$0xff]
    %v211 = vld [vmem:[#allocation9 + $0x328] sm:$0xff]
    %v212 = vld [vmem:[#allocation9 + $0x330] sm:$0xff]
    %v213 = vld [vmem:[#allocation9 + $0x338] sm:$0xff]
    %v214 = vld [vmem:[#allocation9 + $0x340] sm:$0xff]
    %v215 = vld [vmem:[#allocation9 + $0x348] sm:$0xff]
    %v216 = vld [vmem:[#allocation9 + $0x350] sm:$0xff]
    %v217 = vld [vmem:[#allocation9 + $0x358] sm:$0xff]
    %v218 = vld [vmem:[#allocation9 + $0x360] sm:$0xff]
    %v219 = vld [vmem:[#allocation9 + $0x368] sm:$0xff]
    %v220 = vld [vmem:[#allocation9 + $0x370] sm:$0xff]
    %v221 = vld [vmem:[#allocation9 + $0x378] sm:$0xff]
    %v222 = vld [vmem:[#allocation9 + $0x380] sm:$0xff]
    %v223 = vld [vmem:[#allocation9 + $0x388] sm:$0xff]
    %v224 = vld [vmem:[#allocation9 + $0x390] sm:$0xff]
    %v225 = vld [vmem:[#allocation9 + $0x398] sm:$0xff]
    %v226 = vld [vmem:[#allocation9 + $0x3a0] sm:$0xff]
    %v227 = vld [vmem:[#allocation9 + $0x3a8] sm:$0xff]
    %v228 = vld [vmem:[#allocation9 + $0x3b0] sm:$0xff]
    %v229 = vld [vmem:[#allocation9 + $0x3b8] sm:$0xff]
    %v230 = vld [vmem:[#allocation9 + $0x3c0] sm:$0xff]
    %v231 = vld [vmem:[#allocation9 + $0x3c8] sm:$0xff]
    %v232 = vld [vmem:[#allocation9 + $0x3d0] sm:$0xff]
    %v233 = vld [vmem:[#allocation9 + $0x3d8] sm:$0xff]
    %v234 = vld [vmem:[#allocation9 + $0x3e0] sm:$0xff]
    %v235 = vld [vmem:[#allocation9 + $0x3e8] sm:$0xff]
    %v236 = vld [vmem:[#allocation9 + $0x3f0] sm:$0xff]
    %v237 = vld [vmem:[#allocation9 + $0x3f8] sm:$0xff]
    %v238 = vld [vmem:[%s3] sm:$0xf]
    %v240 = vlaneseq
    %v241 = vshrl.u32 %v240, 7
    %v242 = vsub.s32 0, %v241
    %v243 = vrot.slane %v238, %v242
    %v244 = vlaneseq
    %v245 = vshrl.u32 %v244, 7
    %v246 = vsub.s32 1, %v245
    %v247 = vrot.slane %v238, %v246
    %v248 = vlaneseq
    %v249 = vshrl.u32 %v248, 7
    %v250 = vsub.s32 2, %v249
    %v251 = vrot.slane %v238, %v250
    %v252 = vlaneseq
    %v253 = vshrl.u32 %v252, 7
    %v254 = vsub.s32 3, %v253
    %v255 = vrot.slane %v238, %v254
    %v276 = vunpack.c.l.b16 %v94
    %v277 = vunpack.c.h.b16 %v94
    %v278 = vunpack.c.l.b16 %v95
    %v279 = vunpack.c.h.b16 %v95
    %v280 = vunpack.c.l.b16 %v96
    %v281 = vunpack.c.h.b16 %v96
    %v282 = vunpack.c.l.b16 %v97
    %v283 = vunpack.c.h.b16 %v97
    %v284 = vunpack.c.l.b16 %v98
    %v285 = vunpack.c.h.b16 %v98
    %v286 = vunpack.c.l.b16 %v99
    %v287 = vunpack.c.h.b16 %v99
    %v288 = vunpack.c.l.b16 %v100
    %v289 = vunpack.c.h.b16 %v100
    %v290 = vunpack.c.l.b16 %v101
    %v291 = vunpack.c.h.b16 %v101
    %v292 = vunpack.c.l.b16 %v102
    %v293 = vunpack.c.h.b16 %v102
    %v294 = vunpack.c.l.b16 %v103
    %v295 = vunpack.c.h.b16 %v103
    %v296 = vunpack.c.l.b16 %v104
    %v297 = vunpack.c.h.b16 %v104
    %v298 = vunpack.c.l.b16 %v105
    %v299 = vunpack.c.h.b16 %v105
    %v300 = vunpack.c.l.b16 %v106
    %v301 = vunpack.c.h.b16 %v106
    %v302 = vunpack.c.l.b16 %v107
    %v303 = vunpack.c.h.b16 %v107
    %v304 = vunpack.c.l.b16 %v108
    %v305 = vunpack.c.h.b16 %v108
    %v306 = vunpack.c.l.b16 %v109
    %v307 = vunpack.c.h.b16 %v109
    %v308 = vpack.c.b16 %v280, %v276
    %v309 = vpack.c.b16 %v281, %v277
    %v310 = vpack.c.b16 %v282, %v278
    %v311 = vpack.c.b16 %v283, %v279
    %v312 = vpack.c.b16 %v288, %v284
    %v313 = vpack.c.b16 %v289, %v285
    %v314 = vpack.c.b16 %v290, %v286
    %v315 = vpack.c.b16 %v291, %v287
    %v316 = vpack.c.b16 %v296, %v292
    %v317 = vpack.c.b16 %v297, %v293
    %v318 = vpack.c.b16 %v298, %v294
    %v319 = vpack.c.b16 %v299, %v295
    %v320 = vpack.c.b16 %v304, %v300
    %v321 = vpack.c.b16 %v305, %v301
    %v322 = vpack.c.b16 %v306, %v302
    %v323 = vpack.c.b16 %v307, %v303
    %v468 = vunpack.c.l.b16 %v110
    %v469 = vunpack.c.h.b16 %v110
    %v470 = vunpack.c.l.b16 %v111
    %v471 = vunpack.c.h.b16 %v111
    %v472 = vunpack.c.l.b16 %v112
    %v473 = vunpack.c.h.b16 %v112
    %v474 = vunpack.c.l.b16 %v113
    %v475 = vunpack.c.h.b16 %v113
    %v476 = vunpack.c.l.b16 %v114
    %v477 = vunpack.c.h.b16 %v114
    %v478 = vunpack.c.l.b16 %v115
    %v479 = vunpack.c.h.b16 %v115
    %v480 = vunpack.c.l.b16 %v116
    %v481 = vunpack.c.h.b16 %v116
    %v482 = vunpack.c.l.b16 %v117
    %v483 = vunpack.c.h.b16 %v117
    %v484 = vunpack.c.l.b16 %v118
    %v485 = vunpack.c.h.b16 %v118
    %v486 = vunpack.c.l.b16 %v119
    %v487 = vunpack.c.h.b16 %v119
    %v488 = vunpack.c.l.b16 %v120
    %v489 = vunpack.c.h.b16 %v120
    %v490 = vunpack.c.l.b16 %v121
    %v491 = vunpack.c.h.b16 %v121
    %v492 = vunpack.c.l.b16 %v122
    %v493 = vunpack.c.h.b16 %v122
    %v494 = vunpack.c.l.b16 %v123
    %v495 = vunpack.c.h.b16 %v123
    %v496 = vunpack.c.l.b16 %v124
    %v497 = vunpack.c.h.b16 %v124
    %v498 = vunpack.c.l.b16 %v125
    %v499 = vunpack.c.h.b16 %v125
    %v500 = vunpack.c.l.b16 %v126
    %v501 = vunpack.c.h.b16 %v126
    %v502 = vunpack.c.l.b16 %v127
    %v503 = vunpack.c.h.b16 %v127
    %v504 = vunpack.c.l.b16 %v128
    %v505 = vunpack.c.h.b16 %v128
    %v506 = vunpack.c.l.b16 %v129
    %v507 = vunpack.c.h.b16 %v129
    %v508 = vunpack.c.l.b16 %v130
    %v509 = vunpack.c.h.b16 %v130
    %v510 = vunpack.c.l.b16 %v131
    %v511 = vunpack.c.h.b16 %v131
    %v512 = vunpack.c.l.b16 %v132
    %v513 = vunpack.c.h.b16 %v132
    %v514 = vunpack.c.l.b16 %v133
    %v515 = vunpack.c.h.b16 %v133
    %v516 = vunpack.c.l.b16 %v134
    %v517 = vunpack.c.h.b16 %v134
    %v518 = vunpack.c.l.b16 %v135
    %v519 = vunpack.c.h.b16 %v135
    %v520 = vunpack.c.l.b16 %v136
    %v521 = vunpack.c.h.b16 %v136
    %v522 = vunpack.c.l.b16 %v137
    %v523 = vunpack.c.h.b16 %v137
    %v524 = vunpack.c.l.b16 %v138
    %v525 = vunpack.c.h.b16 %v138
    %v526 = vunpack.c.l.b16 %v139
    %v527 = vunpack.c.h.b16 %v139
    %v528 = vunpack.c.l.b16 %v140
    %v529 = vunpack.c.h.b16 %v140
    %v530 = vunpack.c.l.b16 %v141
    %v531 = vunpack.c.h.b16 %v141
    %v532 = vunpack.c.l.b16 %v142
    %v533 = vunpack.c.h.b16 %v142
    %v534 = vunpack.c.l.b16 %v143
    %v535 = vunpack.c.h.b16 %v143
    %v536 = vunpack.c.l.b16 %v144
    %v537 = vunpack.c.h.b16 %v144
    %v538 = vunpack.c.l.b16 %v145
    %v539 = vunpack.c.h.b16 %v145
    %v540 = vunpack.c.l.b16 %v146
    %v541 = vunpack.c.h.b16 %v146
    %v542 = vunpack.c.l.b16 %v147
    %v543 = vunpack.c.h.b16 %v147
    %v544 = vunpack.c.l.b16 %v148
    %v545 = vunpack.c.h.b16 %v148
    %v546 = vunpack.c.l.b16 %v149
    %v547 = vunpack.c.h.b16 %v149
    %v548 = vunpack.c.l.b16 %v150
    %v549 = vunpack.c.h.b16 %v150
    %v550 = vunpack.c.l.b16 %v151
    %v551 = vunpack.c.h.b16 %v151
    %v552 = vunpack.c.l.b16 %v152
    %v553 = vunpack.c.h.b16 %v152
    %v554 = vunpack.c.l.b16 %v153
    %v555 = vunpack.c.h.b16 %v153
    %v556 = vunpack.c.l.b16 %v154
    %v557 = vunpack.c.h.b16 %v154
    %v558 = vunpack.c.l.b16 %v155
    %v559 = vunpack.c.h.b16 %v155
    %v560 = vunpack.c.l.b16 %v156
    %v561 = vunpack.c.h.b16 %v156
    %v562 = vunpack.c.l.b16 %v157
    %v563 = vunpack.c.h.b16 %v157
    %v564 = vunpack.c.l.b16 %v158
    %v565 = vunpack.c.h.b16 %v158
    %v566 = vunpack.c.l.b16 %v159
    %v567 = vunpack.c.h.b16 %v159
    %v568 = vunpack.c.l.b16 %v160
    %v569 = vunpack.c.h.b16 %v160
    %v570 = vunpack.c.l.b16 %v161
    %v571 = vunpack.c.h.b16 %v161
    %v572 = vunpack.c.l.b16 %v162
    %v573 = vunpack.c.h.b16 %v162
    %v574 = vunpack.c.l.b16 %v163
    %v575 = vunpack.c.h.b16 %v163
    %v576 = vunpack.c.l.b16 %v164
    %v577 = vunpack.c.h.b16 %v164
    %v578 = vunpack.c.l.b16 %v165
    %v579 = vunpack.c.h.b16 %v165
    %v580 = vunpack.c.l.b16 %v166
    %v581 = vunpack.c.h.b16 %v166
    %v582 = vunpack.c.l.b16 %v167
    %v583 = vunpack.c.h.b16 %v167
    %v584 = vunpack.c.l.b16 %v168
    %v585 = vunpack.c.h.b16 %v168
    %v586 = vunpack.c.l.b16 %v169
    %v587 = vunpack.c.h.b16 %v169
    %v588 = vunpack.c.l.b16 %v170
    %v589 = vunpack.c.h.b16 %v170
    %v590 = vunpack.c.l.b16 %v171
    %v591 = vunpack.c.h.b16 %v171
    %v592 = vunpack.c.l.b16 %v172
    %v593 = vunpack.c.h.b16 %v172
    %v594 = vunpack.c.l.b16 %v173
    %v595 = vunpack.c.h.b16 %v173
    %v596 = vunpack.c.l.b16 %v174
    %v597 = vunpack.c.h.b16 %v174
    %v598 = vunpack.c.l.b16 %v175
    %v599 = vunpack.c.h.b16 %v175
    %v600 = vunpack.c.l.b16 %v176
    %v601 = vunpack.c.h.b16 %v176
    %v602 = vunpack.c.l.b16 %v177
    %v603 = vunpack.c.h.b16 %v177
    %v604 = vunpack.c.l.b16 %v178
    %v605 = vunpack.c.h.b16 %v178
    %v606 = vunpack.c.l.b16 %v179
    %v607 = vunpack.c.h.b16 %v179
    %v608 = vunpack.c.l.b16 %v180
    %v609 = vunpack.c.h.b16 %v180
    %v610 = vunpack.c.l.b16 %v181
    %v611 = vunpack.c.h.b16 %v181
    %v612 = vunpack.c.l.b16 %v182
    %v613 = vunpack.c.h.b16 %v182
    %v614 = vunpack.c.l.b16 %v183
    %v615 = vunpack.c.h.b16 %v183
    %v616 = vunpack.c.l.b16 %v184
    %v617 = vunpack.c.h.b16 %v184
    %v618 = vunpack.c.l.b16 %v185
    %v619 = vunpack.c.h.b16 %v185
    %v620 = vunpack.c.l.b16 %v186
    %v621 = vunpack.c.h.b16 %v186
    %v622 = vunpack.c.l.b16 %v187
    %v623 = vunpack.c.h.b16 %v187
    %v624 = vunpack.c.l.b16 %v188
    %v625 = vunpack.c.h.b16 %v188
    %v626 = vunpack.c.l.b16 %v189
    %v627 = vunpack.c.h.b16 %v189
    %v628 = vunpack.c.l.b16 %v190
    %v629 = vunpack.c.h.b16 %v190
    %v630 = vunpack.c.l.b16 %v191
    %v631 = vunpack.c.h.b16 %v191
    %v632 = vunpack.c.l.b16 %v192
    %v633 = vunpack.c.h.b16 %v192
    %v634 = vunpack.c.l.b16 %v193
    %v635 = vunpack.c.h.b16 %v193
    %v636 = vunpack.c.l.b16 %v194
    %v637 = vunpack.c.h.b16 %v194
    %v638 = vunpack.c.l.b16 %v195
    %v639 = vunpack.c.h.b16 %v195
    %v640 = vunpack.c.l.b16 %v196
    %v641 = vunpack.c.h.b16 %v196
    %v642 = vunpack.c.l.b16 %v197
    %v643 = vunpack.c.h.b16 %v197
    %v644 = vunpack.c.l.b16 %v198
    %v645 = vunpack.c.h.b16 %v198
    %v646 = vunpack.c.l.b16 %v199
    %v647 = vunpack.c.h.b16 %v199
    %v648 = vunpack.c.l.b16 %v200
    %v649 = vunpack.c.h.b16 %v200
    %v650 = vunpack.c.l.b16 %v201
    %v651 = vunpack.c.h.b16 %v201
    %v652 = vunpack.c.l.b16 %v202
    %v653 = vunpack.c.h.b16 %v202
    %v654 = vunpack.c.l.b16 %v203
    %v655 = vunpack.c.h.b16 %v203
    %v656 = vunpack.c.l.b16 %v204
    %v657 = vunpack.c.h.b16 %v204
    %v658 = vunpack.c.l.b16 %v205
    %v659 = vunpack.c.h.b16 %v205
    %v660 = vunpack.c.l.b16 %v206
    %v661 = vunpack.c.h.b16 %v206
    %v662 = vunpack.c.l.b16 %v207
    %v663 = vunpack.c.h.b16 %v207
    %v664 = vunpack.c.l.b16 %v208
    %v665 = vunpack.c.h.b16 %v208
    %v666 = vunpack.c.l.b16 %v209
    %v667 = vunpack.c.h.b16 %v209
    %v668 = vunpack.c.l.b16 %v210
    %v669 = vunpack.c.h.b16 %v210
    %v670 = vunpack.c.l.b16 %v211
    %v671 = vunpack.c.h.b16 %v211
    %v672 = vunpack.c.l.b16 %v212
    %v673 = vunpack.c.h.b16 %v212
    %v674 = vunpack.c.l.b16 %v213
    %v675 = vunpack.c.h.b16 %v213
    %v676 = vunpack.c.l.b16 %v214
    %v677 = vunpack.c.h.b16 %v214
    %v678 = vunpack.c.l.b16 %v215
    %v679 = vunpack.c.h.b16 %v215
    %v680 = vunpack.c.l.b16 %v216
    %v681 = vunpack.c.h.b16 %v216
    %v682 = vunpack.c.l.b16 %v217
    %v683 = vunpack.c.h.b16 %v217
    %v684 = vunpack.c.l.b16 %v218
    %v685 = vunpack.c.h.b16 %v218
    %v686 = vunpack.c.l.b16 %v219
    %v687 = vunpack.c.h.b16 %v219
    %v688 = vunpack.c.l.b16 %v220
    %v689 = vunpack.c.h.b16 %v220
    %v690 = vunpack.c.l.b16 %v221
    %v691 = vunpack.c.h.b16 %v221
    %v692 = vunpack.c.l.b16 %v222
    %v693 = vunpack.c.h.b16 %v222
    %v694 = vunpack.c.l.b16 %v223
    %v695 = vunpack.c.h.b16 %v223
    %v696 = vunpack.c.l.b16 %v224
    %v697 = vunpack.c.h.b16 %v224
    %v698 = vunpack.c.l.b16 %v225
    %v699 = vunpack.c.h.b16 %v225
    %v700 = vunpack.c.l.b16 %v226
    %v701 = vunpack.c.h.b16 %v226
    %v702 = vunpack.c.l.b16 %v227
    %v703 = vunpack.c.h.b16 %v227
    %v704 = vunpack.c.l.b16 %v228
    %v705 = vunpack.c.h.b16 %v228
    %v706 = vunpack.c.l.b16 %v229
    %v707 = vunpack.c.h.b16 %v229
    %v708 = vunpack.c.l.b16 %v230
    %v709 = vunpack.c.h.b16 %v230
    %v710 = vunpack.c.l.b16 %v231
    %v711 = vunpack.c.h.b16 %v231
    %v712 = vunpack.c.l.b16 %v232
    %v713 = vunpack.c.h.b16 %v232
    %v714 = vunpack.c.l.b16 %v233
    %v715 = vunpack.c.h.b16 %v233
    %v716 = vunpack.c.l.b16 %v234
    %v717 = vunpack.c.h.b16 %v234
    %v718 = vunpack.c.l.b16 %v235
    %v719 = vunpack.c.h.b16 %v235
    %v720 = vunpack.c.l.b16 %v236
    %v721 = vunpack.c.h.b16 %v236
    %v722 = vunpack.c.l.b16 %v237
    %v723 = vunpack.c.h.b16 %v237
    %v724 = vpack.c.b16 %v472, %v468
    %v725 = vpack.c.b16 %v473, %v469
    %v726 = vpack.c.b16 %v474, %v470
    %v727 = vpack.c.b16 %v475, %v471
    %v728 = vpack.c.b16 %v480, %v476
    %v729 = vpack.c.b16 %v481, %v477
    %v730 = vpack.c.b16 %v482, %v478
    %v731 = vpack.c.b16 %v483, %v479
    %v732 = vpack.c.b16 %v488, %v484
    %v733 = vpack.c.b16 %v489, %v485
    %v734 = vpack.c.b16 %v490, %v486
    %v735 = vpack.c.b16 %v491, %v487
    %v736 = vpack.c.b16 %v496, %v492
    %v737 = vpack.c.b16 %v497, %v493
    %v738 = vpack.c.b16 %v498, %v494
    %v739 = vpack.c.b16 %v499, %v495
    %v740 = vpack.c.b16 %v504, %v500
    %v741 = vpack.c.b16 %v505, %v501
    %v742 = vpack.c.b16 %v506, %v502
    %v743 = vpack.c.b16 %v507, %v503
    %v744 = vpack.c.b16 %v512, %v508
    %v745 = vpack.c.b16 %v513, %v509
    %v746 = vpack.c.b16 %v514, %v510
    %v747 = vpack.c.b16 %v515, %v511
    %v748 = vpack.c.b16 %v520, %v516
    %v749 = vpack.c.b16 %v521, %v517
    %v750 = vpack.c.b16 %v522, %v518
    %v751 = vpack.c.b16 %v523, %v519
    %v752 = vpack.c.b16 %v528, %v524
    %v753 = vpack.c.b16 %v529, %v525
    %v754 = vpack.c.b16 %v530, %v526
    %v755 = vpack.c.b16 %v531, %v527
    %v756 = vpack.c.b16 %v536, %v532
    %v757 = vpack.c.b16 %v537, %v533
    %v758 = vpack.c.b16 %v538, %v534
    %v759 = vpack.c.b16 %v539, %v535
    %v760 = vpack.c.b16 %v544, %v540
    %v761 = vpack.c.b16 %v545, %v541
    %v762 = vpack.c.b16 %v546, %v542
    %v763 = vpack.c.b16 %v547, %v543
    %v764 = vpack.c.b16 %v552, %v548
    %v765 = vpack.c.b16 %v553, %v549
    %v766 = vpack.c.b16 %v554, %v550
    %v767 = vpack.c.b16 %v555, %v551
    %v768 = vpack.c.b16 %v560, %v556
    %v769 = vpack.c.b16 %v561, %v557
    %v770 = vpack.c.b16 %v562, %v558
    %v771 = vpack.c.b16 %v563, %v559
    %v772 = vpack.c.b16 %v568, %v564
    %v773 = vpack.c.b16 %v569, %v565
    %v774 = vpack.c.b16 %v570, %v566
    %v775 = vpack.c.b16 %v571, %v567
    %v776 = vpack.c.b16 %v576, %v572
    %v777 = vpack.c.b16 %v577, %v573
    %v778 = vpack.c.b16 %v578, %v574
    %v779 = vpack.c.b16 %v579, %v575
    %v780 = vpack.c.b16 %v584, %v580
    %v781 = vpack.c.b16 %v585, %v581
    %v782 = vpack.c.b16 %v586, %v582
    %v783 = vpack.c.b16 %v587, %v583
    %v784 = vpack.c.b16 %v592, %v588
    %v785 = vpack.c.b16 %v593, %v589
    %v786 = vpack.c.b16 %v594, %v590
    %v787 = vpack.c.b16 %v595, %v591
    %v788 = vpack.c.b16 %v600, %v596
    %v789 = vpack.c.b16 %v601, %v597
    %v790 = vpack.c.b16 %v602, %v598
    %v791 = vpack.c.b16 %v603, %v599
    %v792 = vpack.c.b16 %v608, %v604
    %v793 = vpack.c.b16 %v609, %v605
    %v794 = vpack.c.b16 %v610, %v606
    %v795 = vpack.c.b16 %v611, %v607
    %v796 = vpack.c.b16 %v616, %v612
    %v797 = vpack.c.b16 %v617, %v613
    %v798 = vpack.c.b16 %v618, %v614
    %v799 = vpack.c.b16 %v619, %v615
    %v800 = vpack.c.b16 %v624, %v620
    %v801 = vpack.c.b16 %v625, %v621
    %v802 = vpack.c.b16 %v626, %v622
    %v803 = vpack.c.b16 %v627, %v623
    %v804 = vpack.c.b16 %v632, %v628
    %v805 = vpack.c.b16 %v633, %v629
    %v806 = vpack.c.b16 %v634, %v630
    %v807 = vpack.c.b16 %v635, %v631
    %v808 = vpack.c.b16 %v640, %v636
    %v809 = vpack.c.b16 %v641, %v637
    %v810 = vpack.c.b16 %v642, %v638
    %v811 = vpack.c.b16 %v643, %v639
    %v812 = vpack.c.b16 %v648, %v644
    %v813 = vpack.c.b16 %v649, %v645
    %v814 = vpack.c.b16 %v650, %v646
    %v815 = vpack.c.b16 %v651, %v647
    %v816 = vpack.c.b16 %v656, %v652
    %v817 = vpack.c.b16 %v657, %v653
    %v818 = vpack.c.b16 %v658, %v654
    %v819 = vpack.c.b16 %v659, %v655
    %v820 = vpack.c.b16 %v664, %v660
    %v821 = vpack.c.b16 %v665, %v661
    %v822 = vpack.c.b16 %v666, %v662
    %v823 = vpack.c.b16 %v667, %v663
    %v824 = vpack.c.b16 %v672, %v668
    %v825 = vpack.c.b16 %v673, %v669
    %v826 = vpack.c.b16 %v674, %v670
    %v827 = vpack.c.b16 %v675, %v671
    %v828 = vpack.c.b16 %v680, %v676
    %v829 = vpack.c.b16 %v681, %v677
    %v830 = vpack.c.b16 %v682, %v678
    %v831 = vpack.c.b16 %v683, %v679
    %v832 = vpack.c.b16 %v688, %v684
    %v833 = vpack.c.b16 %v689, %v685
    %v834 = vpack.c.b16 %v690, %v686
    %v835 = vpack.c.b16 %v691, %v687
    %v836 = vpack.c.b16 %v696, %v692
    %v837 = vpack.c.b16 %v697, %v693
    %v838 = vpack.c.b16 %v698, %v694
    %v839 = vpack.c.b16 %v699, %v695
    %v840 = vpack.c.b16 %v704, %v700
    %v841 = vpack.c.b16 %v705, %v701
    %v842 = vpack.c.b16 %v706, %v702
    %v843 = vpack.c.b16 %v707, %v703
    %v844 = vpack.c.b16 %v712, %v708
    %v845 = vpack.c.b16 %v713, %v709
    %v846 = vpack.c.b16 %v714, %v710
    %v847 = vpack.c.b16 %v715, %v711
    %v848 = vpack.c.b16 %v720, %v716
    %v849 = vpack.c.b16 %v721, %v717
    %v850 = vpack.c.b16 %v722, %v718
    %v851 = vpack.c.b16 %v723, %v719
    %980 = vmatprep.subr.bf16.mxu0 %v753
    %981 = vmatpush1.bf16.msra.mxu0 %v752
    %982 = vmatprep.subr.bf16.mxu0 %v749
    %983 = vmatpush1.bf16.msra.mxu0 %v748
    %984 = vmatprep.subr.bf16.mxu0 %v745
    %985 = vmatpush1.bf16.msra.mxu0 %v744
    %986 = vmatprep.subr.bf16.mxu0 %v741
    %987 = vmatpush1.bf16.msra.mxu0 %v740
    %988 = vmatprep.subr.bf16.mxu0 %v737
    %989 = vmatpush1.bf16.msra.mxu0 %v736
    %990 = vmatprep.subr.bf16.mxu0 %v733
    %991 = vmatpush1.bf16.msra.mxu0 %v732
    %992 = vmatprep.subr.bf16.mxu0 %v729
    %993 = vmatpush1.bf16.msra.mxu0 %v728
    %994 = vmatprep.subr.bf16.mxu0 %v725
    %995 = vmatpush1.bf16.msra.mxu0 %v724
    %996 = vmatprep.subr.bf16.mxu0 %v785
    %997 = vmatpush2.bf16.msra.mxu0 %v784
    %998 = vmatprep.subr.bf16.mxu0 %v781
    %999 = vmatpush2.bf16.msra.mxu0 %v780
    %1000 = vmatprep.subr.bf16.mxu0 %v777
    %1001 = vmatpush2.bf16.msra.mxu0 %v776
    %1002 = vmatprep.subr.bf16.mxu0 %v773
    %1003 = vmatpush2.bf16.msra.mxu0 %v772
    %1004 = vmatprep.subr.bf16.mxu0 %v769
    %1005 = vmatpush2.bf16.msra.mxu0 %v768
    %1006 = vmatprep.subr.bf16.mxu0 %v765
    %1007 = vmatpush2.bf16.msra.mxu0 %v764
    %1008 = vmatprep.subr.bf16.mxu0 %v761
    %1009 = vmatpush2.bf16.msra.mxu0 %v760
    %1010 = vmatprep.subr.bf16.mxu0 %v757
    %1011 = vmatpush2.bf16.msra.mxu0 %v756
    %1012 = vmatprep.mubr.bf16.mxu0 %v309
    %1013 = vmatmul.mubr.bf16.gmra.mxu0 %v308
    %v1014 = vpop.f32.mrf.mxu0
    %v1015 = vadd.f32 %v243, %v1014
    %v1016 = vpop.f32.mrf.mxu0
    %v1017 = vadd.f32 %v247, %v1016
    %v1018 = vpop.f32.mrf.mxu0
    %v1019 = vadd.f32 %v243, %v1018
    %v1020 = vpop.f32.mrf.mxu0
    %v1021 = vadd.f32 %v247, %v1020
    %1022 = vmatprep.mubr.bf16.mxu0 %v313
    %1023 = vmatmul.mubr.bf16.gmra.mxu0 %v312
    %v1024 = vpop.f32.mrf.mxu0
    %v1025 = vadd.f32 %v243, %v1024
    %v1026 = vpop.f32.mrf.mxu0
    %v1027 = vadd.f32 %v247, %v1026
    %v1028 = vpop.f32.mrf.mxu0
    %v1029 = vadd.f32 %v243, %v1028
    %v1030 = vpop.f32.mrf.mxu0
    %v1031 = vadd.f32 %v247, %v1030
    %1032 = vmatprep.mubr.bf16.mxu0 %v317
    %1033 = vmatmul.mubr.bf16.gmra.mxu0 %v316
    %v1034 = vpop.f32.mrf.mxu0
    %v1035 = vadd.f32 %v243, %v1034
    %v1036 = vpop.f32.mrf.mxu0
    %v1037 = vadd.f32 %v247, %v1036
    %v1038 = vpop.f32.mrf.mxu0
    %v1039 = vadd.f32 %v243, %v1038
    %v1040 = vpop.f32.mrf.mxu0
    %v1041 = vadd.f32 %v247, %v1040
    %1042 = vmatprep.mubr.bf16.mxu0 %v321
    %1043 = vmatmul.mubr.bf16.gmra.mxu0 %v320
    %v1044 = vpop.f32.mrf.mxu0
    %v1045 = vadd.f32 %v243, %v1044
    %v1046 = vpop.f32.mrf.mxu0
    %v1047 = vadd.f32 %v247, %v1046
    %v1048 = vpop.f32.mrf.mxu0
    %v1049 = vadd.f32 %v243, %v1048
    %v1050 = vpop.f32.mrf.mxu0
    %v1051 = vadd.f32 %v247, %v1050
    %1052 = vdwg.mxu0
    %1053 = vmatprep.subr.bf16.mxu0 %v817
    %1054 = vmatpush1.bf16.msra.mxu0 %v816
    %1055 = vmatprep.subr.bf16.mxu0 %v813
    %1056 = vmatpush1.bf16.msra.mxu0 %v812
    %1057 = vmatprep.subr.bf16.mxu0 %v809
    %1058 = vmatpush1.bf16.msra.mxu0 %v808
    %1059 = vmatprep.subr.bf16.mxu0 %v805
    %1060 = vmatpush1.bf16.msra.mxu0 %v804
    %1061 = vmatprep.subr.bf16.mxu0 %v801
    %1062 = vmatpush1.bf16.msra.mxu0 %v800
    %1063 = vmatprep.subr.bf16.mxu0 %v797
    %1064 = vmatpush1.bf16.msra.mxu0 %v796
    %1065 = vmatprep.subr.bf16.mxu0 %v793
    %1066 = vmatpush1.bf16.msra.mxu0 %v792
    %1067 = vmatprep.subr.bf16.mxu0 %v789
    %1068 = vmatpush1.bf16.msra.mxu0 %v788
    %1069 = vmatprep.subr.bf16.mxu0 %v849
    %1070 = vmatpush2.bf16.msra.mxu0 %v848
    %1071 = vmatprep.subr.bf16.mxu0 %v845
    %1072 = vmatpush2.bf16.msra.mxu0 %v844
    %1073 = vmatprep.subr.bf16.mxu0 %v841
    %1074 = vmatpush2.bf16.msra.mxu0 %v840
    %1075 = vmatprep.subr.bf16.mxu0 %v837
    %1076 = vmatpush2.bf16.msra.mxu0 %v836
    %1077 = vmatprep.subr.bf16.mxu0 %v833
    %1078 = vmatpush2.bf16.msra.mxu0 %v832
    %1079 = vmatprep.subr.bf16.mxu0 %v829
    %1080 = vmatpush2.bf16.msra.mxu0 %v828
    %1081 = vmatprep.subr.bf16.mxu0 %v825
    %1082 = vmatpush2.bf16.msra.mxu0 %v824
    %1083 = vmatprep.subr.bf16.mxu0 %v821
    %1084 = vmatpush2.bf16.msra.mxu0 %v820
    %1085 = vmatprep.mubr.bf16.mxu0 %v311
    %1086 = vmatmul.mubr.bf16.gmra.mxu0 %v310
    %v1087 = vpop.f32.mrf.mxu0
    %v1088 = vadd.f32 %v1015, %v1087
    %v1089 = vpop.f32.mrf.mxu0
    %v1090 = vadd.f32 %v1017, %v1089
    %v1091 = vpop.f32.mrf.mxu0
    %v1092 = vadd.f32 %v1019, %v1091
    %v1093 = vpop.f32.mrf.mxu0
    %v1094 = vadd.f32 %v1021, %v1093
    %1095 = vmatprep.mubr.bf16.mxu0 %v315
    %1096 = vmatmul.mubr.bf16.gmra.mxu0 %v314
    %v1097 = vpop.f32.mrf.mxu0
    %v1098 = vadd.f32 %v1025, %v1097
    %v1099 = vpop.f32.mrf.mxu0
    %v1100 = vadd.f32 %v1027, %v1099
    %v1101 = vpop.f32.mrf.mxu0
    %v1102 = vadd.f32 %v1029, %v1101
    %v1103 = vpop.f32.mrf.mxu0
    %v1104 = vadd.f32 %v1031, %v1103
    %1105 = vmatprep.mubr.bf16.mxu0 %v319
    %1106 = vmatmul.mubr.bf16.gmra.mxu0 %v318
    %v1107 = vpop.f32.mrf.mxu0
    %v1108 = vadd.f32 %v1035, %v1107
    %v1109 = vpop.f32.mrf.mxu0
    %v1110 = vadd.f32 %v1037, %v1109
    %v1111 = vpop.f32.mrf.mxu0
    %v1112 = vadd.f32 %v1039, %v1111
    %v1113 = vpop.f32.mrf.mxu0
    %v1114 = vadd.f32 %v1041, %v1113
    %1115 = vmatprep.mubr.bf16.mxu0 %v323
    %1116 = vmatmul.mubr.bf16.gmra.mxu0 %v322
    %v1117 = vpop.f32.mrf.mxu0
    %v1118 = vadd.f32 %v1045, %v1117
    %v1119 = vpop.f32.mrf.mxu0
    %v1120 = vadd.f32 %v1047, %v1119
    %v1121 = vpop.f32.mrf.mxu0
    %v1122 = vadd.f32 %v1049, %v1121
    %v1123 = vpop.f32.mrf.mxu0
    %v1124 = vadd.f32 %v1051, %v1123
    %1125 = vdwg.mxu0
    %1126 = vmatprep.subr.bf16.mxu0 %v755
    %1127 = vmatpush1.bf16.msra.mxu0 %v754
    %1128 = vmatprep.subr.bf16.mxu0 %v751
    %1129 = vmatpush1.bf16.msra.mxu0 %v750
    %1130 = vmatprep.subr.bf16.mxu0 %v747
    %1131 = vmatpush1.bf16.msra.mxu0 %v746
    %1132 = vmatprep.subr.bf16.mxu0 %v743
    %1133 = vmatpush1.bf16.msra.mxu0 %v742
    %1134 = vmatprep.subr.bf16.mxu0 %v739
    %1135 = vmatpush1.bf16.msra.mxu0 %v738
    %1136 = vmatprep.subr.bf16.mxu0 %v735
    %1137 = vmatpush1.bf16.msra.mxu0 %v734
    %1138 = vmatprep.subr.bf16.mxu0 %v731
    %1139 = vmatpush1.bf16.msra.mxu0 %v730
    %1140 = vmatprep.subr.bf16.mxu0 %v727
    %1141 = vmatpush1.bf16.msra.mxu0 %v726
    %1142 = vmatprep.subr.bf16.mxu0 %v787
    %1143 = vmatpush2.bf16.msra.mxu0 %v786
    %1144 = vmatprep.subr.bf16.mxu0 %v783
    %1145 = vmatpush2.bf16.msra.mxu0 %v782
    %1146 = vmatprep.subr.bf16.mxu0 %v779
    %1147 = vmatpush2.bf16.msra.mxu0 %v778
    %1148 = vmatprep.subr.bf16.mxu0 %v775
    %1149 = vmatpush2.bf16.msra.mxu0 %v774
    %1150 = vmatprep.subr.bf16.mxu0 %v771
    %1151 = vmatpush2.bf16.msra.mxu0 %v770
    %1152 = vmatprep.subr.bf16.mxu0 %v767
    %1153 = vmatpush2.bf16.msra.mxu0 %v766
    %1154 = vmatprep.subr.bf16.mxu0 %v763
    %1155 = vmatpush2.bf16.msra.mxu0 %v762
    %1156 = vmatprep.subr.bf16.mxu0 %v759
    %1157 = vmatpush2.bf16.msra.mxu0 %v758
    %1158 = vmatprep.mubr.bf16.mxu0 %v309
    %1159 = vmatmul.mubr.bf16.gmra.mxu0 %v308
    %v1160 = vpop.f32.mrf.mxu0
    %v1161 = vadd.f32 %v251, %v1160
    %v1162 = vpop.f32.mrf.mxu0
    %v1163 = vadd.f32 %v255, %v1162
    %v1164 = vpop.f32.mrf.mxu0
    %v1165 = vadd.f32 %v251, %v1164
    %v1166 = vpop.f32.mrf.mxu0
    %v1167 = vadd.f32 %v255, %v1166
    %1168 = vmatprep.mubr.bf16.mxu0 %v313
    %1169 = vmatmul.mubr.bf16.gmra.mxu0 %v312
    %v1170 = vpop.f32.mrf.mxu0
    %v1171 = vadd.f32 %v251, %v1170
    %v1172 = vpop.f32.mrf.mxu0
    %v1173 = vadd.f32 %v255, %v1172
    %v1174 = vpop.f32.mrf.mxu0
    %v1175 = vadd.f32 %v251, %v1174
    %v1176 = vpop.f32.mrf.mxu0
    %v1177 = vadd.f32 %v255, %v1176
    %1178 = vmatprep.mubr.bf16.mxu0 %v317
    %1179 = vmatmul.mubr.bf16.gmra.mxu0 %v316
    %v1180 = vpop.f32.mrf.mxu0
    %v1181 = vadd.f32 %v251, %v1180
    %v1182 = vpop.f32.mrf.mxu0
    %v1183 = vadd.f32 %v255, %v1182
    %v1184 = vpop.f32.mrf.mxu0
    %v1185 = vadd.f32 %v251, %v1184
    %v1186 = vpop.f32.mrf.mxu0
    %v1187 = vadd.f32 %v255, %v1186
    %1188 = vmatprep.mubr.bf16.mxu0 %v321
    %1189 = vmatmul.mubr.bf16.gmra.mxu0 %v320
    %v1190 = vpop.f32.mrf.mxu0
    %v1191 = vadd.f32 %v251, %v1190
    %v1192 = vpop.f32.mrf.mxu0
    %v1193 = vadd.f32 %v255, %v1192
    %v1194 = vpop.f32.mrf.mxu0
    %v1195 = vadd.f32 %v251, %v1194
    %v1196 = vpop.f32.mrf.mxu0
    %v1197 = vadd.f32 %v255, %v1196
    %1198 = vdwg.mxu0
    %1199 = vmatprep.subr.bf16.mxu0 %v819
    %1200 = vmatpush1.bf16.msra.mxu0 %v818
    %1201 = vmatprep.subr.bf16.mxu0 %v815
    %1202 = vmatpush1.bf16.msra.mxu0 %v814
    %1203 = vmatprep.subr.bf16.mxu0 %v811
    %1204 = vmatpush1.bf16.msra.mxu0 %v810
    %1205 = vmatprep.subr.bf16.mxu0 %v807
    %1206 = vmatpush1.bf16.msra.mxu0 %v806
    %1207 = vmatprep.subr.bf16.mxu0 %v803
    %1208 = vmatpush1.bf16.msra.mxu0 %v802
    %1209 = vmatprep.subr.bf16.mxu0 %v799
    %1210 = vmatpush1.bf16.msra.mxu0 %v798
    %1211 = vmatprep.subr.bf16.mxu0 %v795
    %1212 = vmatpush1.bf16.msra.mxu0 %v794
    %1213 = vmatprep.subr.bf16.mxu0 %v791
    %1214 = vmatpush1.bf16.msra.mxu0 %v790
    %1215 = vmatprep.subr.bf16.mxu0 %v851
    %1216 = vmatpush2.bf16.msra.mxu0 %v850
    %1217 = vmatprep.subr.bf16.mxu0 %v847
    %1218 = vmatpush2.bf16.msra.mxu0 %v846
    %1219 = vmatprep.subr.bf16.mxu0 %v843
    %1220 = vmatpush2.bf16.msra.mxu0 %v842
    %1221 = vmatprep.subr.bf16.mxu0 %v839
    %1222 = vmatpush2.bf16.msra.mxu0 %v838
    %1223 = vmatprep.subr.bf16.mxu0 %v835
    %1224 = vmatpush2.bf16.msra.mxu0 %v834
    %1225 = vmatprep.subr.bf16.mxu0 %v831
    %1226 = vmatpush2.bf16.msra.mxu0 %v830
    %1227 = vmatprep.subr.bf16.mxu0 %v827
    %1228 = vmatpush2.bf16.msra.mxu0 %v826
    %1229 = vmatprep.subr.bf16.mxu0 %v823
    %1230 = vmatpush2.bf16.msra.mxu0 %v822
    %1231 = vmatprep.mubr.bf16.mxu0 %v311
    %1232 = vmatmul.mubr.bf16.gmra.mxu0 %v310
    %v1233 = vpop.f32.mrf.mxu0
    %v1234 = vadd.f32 %v1161, %v1233
    %v1235 = vpop.f32.mrf.mxu0
    %v1236 = vadd.f32 %v1163, %v1235
    %v1237 = vpop.f32.mrf.mxu0
    %v1238 = vadd.f32 %v1165, %v1237
    %v1239 = vpop.f32.mrf.mxu0
    %v1240 = vadd.f32 %v1167, %v1239
    %1241 = vmatprep.mubr.bf16.mxu0 %v315
    %1242 = vmatmul.mubr.bf16.gmra.mxu0 %v314
    %v1243 = vpop.f32.mrf.mxu0
    %v1244 = vadd.f32 %v1171, %v1243
    %v1245 = vpop.f32.mrf.mxu0
    %v1246 = vadd.f32 %v1173, %v1245
    %v1247 = vpop.f32.mrf.mxu0
    %v1248 = vadd.f32 %v1175, %v1247
    %v1249 = vpop.f32.mrf.mxu0
    %v1250 = vadd.f32 %v1177, %v1249
    %1251 = vmatprep.mubr.bf16.mxu0 %v319
    %1252 = vmatmul.mubr.bf16.gmra.mxu0 %v318
    %v1253 = vpop.f32.mrf.mxu0
    %v1254 = vadd.f32 %v1181, %v1253
    %v1255 = vpop.f32.mrf.mxu0
    %v1256 = vadd.f32 %v1183, %v1255
    %v1257 = vpop.f32.mrf.mxu0
    %v1258 = vadd.f32 %v1185, %v1257
    %v1259 = vpop.f32.mrf.mxu0
    %v1260 = vadd.f32 %v1187, %v1259
    %1261 = vmatprep.mubr.bf16.mxu0 %v323
    %1262 = vmatmul.mubr.bf16.gmra.mxu0 %v322
    %v1263 = vpop.f32.mrf.mxu0
    %v1264 = vadd.f32 %v1191, %v1263
    %v1265 = vpop.f32.mrf.mxu0
    %v1266 = vadd.f32 %v1193, %v1265
    %v1267 = vpop.f32.mrf.mxu0
    %v1268 = vadd.f32 %v1195, %v1267
    %v1269 = vpop.f32.mrf.mxu0
    %v1270 = vadd.f32 %v1197, %v1269
    %1271 = vdwg.mxu0
    %1272 = vst [vmem:[#allocation3] sm:$0xff] %v1088
    %1273 = vst [vmem:[#allocation3 + $0x8] sm:$0xff] %v1090
    %1274 = vst [vmem:[#allocation3 + $0x10] sm:$0xff] %v1234
    %1275 = vst [vmem:[#allocation3 + $0x18] sm:$0xff] %v1236
    %1276 = vst [vmem:[#allocation3 + $0x20] sm:$0xff] %v1092
    %1277 = vst [vmem:[#allocation3 + $0x28] sm:$0xff] %v1094
    %1278 = vst [vmem:[#allocation3 + $0x30] sm:$0xff] %v1238
    %1279 = vst [vmem:[#allocation3 + $0x38] sm:$0xff] %v1240
    %1280 = vst [vmem:[#allocation3 + $0x40] sm:$0xff] %v1098
    %1281 = vst [vmem:[#allocation3 + $0x48] sm:$0xff] %v1100
    %1282 = vst [vmem:[#allocation3 + $0x50] sm:$0xff] %v1244
    %1283 = vst [vmem:[#allocation3 + $0x58] sm:$0xff] %v1246
    %1284 = vst [vmem:[#allocation3 + $0x60] sm:$0xff] %v1102
    %1285 = vst [vmem:[#allocation3 + $0x68] sm:$0xff] %v1104
    %1286 = vst [vmem:[#allocation3 + $0x70] sm:$0xff] %v1248
    %1287 = vst [vmem:[#allocation3 + $0x78] sm:$0xff] %v1250
    %1288 = vst [vmem:[#allocation3 + $0x80] sm:$0xff] %v1108
    %1289 = vst [vmem:[#allocation3 + $0x88] sm:$0xff] %v1110
    %1290 = vst [vmem:[#allocation3 + $0x90] sm:$0xff] %v1254
    %1291 = vst [vmem:[#allocation3 + $0x98] sm:$0xff] %v1256
    %1292 = vst [vmem:[#allocation3 + $0xa0] sm:$0xff] %v1112
    %1293 = vst [vmem:[#allocation3 + $0xa8] sm:$0xff] %v1114
    %1294 = vst [vmem:[#allocation3 + $0xb0] sm:$0xff] %v1258
    %1295 = vst [vmem:[#allocation3 + $0xb8] sm:$0xff] %v1260
    %1296 = vst [vmem:[#allocation3 + $0xc0] sm:$0xff] %v1118
    %1297 = vst [vmem:[#allocation3 + $0xc8] sm:$0xff] %v1120
    %1298 = vst [vmem:[#allocation3 + $0xd0] sm:$0xff] %v1264
    %1299 = vst [vmem:[#allocation3 + $0xd8] sm:$0xff] %v1266
    %1300 = vst [vmem:[#allocation3 + $0xe0] sm:$0xff] %v1122
    %1301 = vst [vmem:[#allocation3 + $0xe8] sm:$0xff] %v1124
    %1302 = vst [vmem:[#allocation3 + $0xf0] sm:$0xff] %v1268
    %1303 = vst [vmem:[#allocation3 + $0xf8] sm:$0xff] %v1270
    %v1304 = vld [vmem:[#allocation2] sm:$0xff]
    %v1305 = vld [vmem:[#allocation2 + $0x8] sm:$0xff]
    %v1306 = vld [vmem:[#allocation2 + $0x10] sm:$0xff]
    %v1307 = vld [vmem:[#allocation2 + $0x18] sm:$0xff]
    %vm1308 = vcmp.gt.f32.partialorder %v1304, 1.0
    %vm1309 = vcmp.gt.f32.partialorder %v1305, 1.0
    %vm1310 = vcmp.gt.f32.partialorder %v1306, 1.0
    %vm1311 = vcmp.gt.f32.partialorder %v1307, 1.0
    %v1312 = vsel %vm1308, 1, 0
    %v1313 = vsel %vm1309, 1, 0
    %v1314 = vsel %vm1310, 1, 0
    %v1315 = vsel %vm1311, 1, 0
    %v1316 = vcvt.s32.f32 %v1312
    %v1317 = vcvt.s32.f32 %v1313
    %v1318 = vcvt.s32.f32 %v1314
    %v1319 = vcvt.s32.f32 %v1315
    %v1320 = vmul.f32 %v1304, 0.88
    %v1321 = vmul.f32 %v1305, 0.88
    %v1322 = vmul.f32 %v1306, 0.88
    %v1323 = vmul.f32 %v1307, 0.88
    %v1324 = vld [vmem:[#allocation3] sm:$0xff]
    %v1325 = vld [vmem:[#allocation3 + $0x8] sm:$0xff]
    %v1326 = vld [vmem:[#allocation3 + $0x10] sm:$0xff]
    %v1327 = vld [vmem:[#allocation3 + $0x18] sm:$0xff]
    %v1328 = vadd.f32 %v1320, %v1324
    %v1329 = vadd.f32 %v1321, %v1325
    %v1330 = vadd.f32 %v1322, %v1326
    %v1331 = vadd.f32 %v1323, %v1327
    %v1332 = vsub.f32 %v1328, %v1316
    %v1333 = vsub.f32 %v1329, %v1317
    %v1334 = vsub.f32 %v1330, %v1318
    %v1335 = vsub.f32 %v1331, %v1319
    %vm1336 = vcmp.gt.f32.partialorder %v1332, 1.0
    %vm1337 = vcmp.gt.f32.partialorder %v1333, 1.0
    %vm1338 = vcmp.gt.f32.partialorder %v1334, 1.0
    %vm1339 = vcmp.gt.f32.partialorder %v1335, 1.0
    %v1340 = vsel %vm1336, 1, 0
    %v1341 = vsel %vm1337, 1, 0
    %v1342 = vsel %vm1338, 1, 0
    %v1343 = vsel %vm1339, 1, 0
    %v1344 = vcvt.s32.f32 %v1340
    %v1345 = vcvt.s32.f32 %v1341
    %v1346 = vcvt.s32.f32 %v1342
    %v1347 = vcvt.s32.f32 %v1343
    %v1348 = vpack.c.bf16 %v1344, %v1344
    %v1349 = vpack.c.bf16 %v1345, %v1345
    %v1350 = vpack.c.bf16 %v1346, %v1346
    %v1351 = vpack.c.bf16 %v1347, %v1347
    %v1356 = vunpack.c.l.b16 %v1348
    %v1357 = vunpack.c.l.b16 %v1349
    %v1358 = vunpack.c.l.b16 %v1350
    %v1359 = vunpack.c.l.b16 %v1351
    %v1360 = vpack.c.b16 %v1357, %v1356
    %v1361 = vpack.c.b16 %v1359, %v1358
    %1364 = vst [vmem:[#allocation12] sm:$0xff] %v1360
    %1365 = vst [vmem:[#allocation12 + $0x8] sm:$0xff] %v1361
    %1366 = vst [vmem:[#allocation13] sm:$0xff] %v1332
    %1367 = vst [vmem:[#allocation13 + $0x8] sm:$0xff] %v1333
    %1368 = vst [vmem:[#allocation13 + $0x10] sm:$0xff] %v1334
    %1369 = vst [vmem:[#allocation13 + $0x18] sm:$0xff] %v1335
    %v1370 = vmul.f32 %v1332, 0.88
    %v1371 = vmul.f32 %v1333, 0.88
    %v1372 = vmul.f32 %v1334, 0.88
    %v1373 = vmul.f32 %v1335, 0.88
    %s1374 = scalar_lea.vmem [#allocation3], 32
    %v1375 = vld [vmem:[%s1374] sm:$0xff]
    %v1376 = vld [vmem:[%s1374 + $0x8] sm:$0xff]
    %v1377 = vld [vmem:[%s1374 + $0x10] sm:$0xff]
    %v1378 = vld [vmem:[%s1374 + $0x18] sm:$0xff]
    %v1379 = vadd.f32 %v1370, %v1375
    %v1380 = vadd.f32 %v1371, %v1376
    %v1381 = vadd.f32 %v1372, %v1377
    %v1382 = vadd.f32 %v1373, %v1378
    %v1383 = vsub.f32 %v1379, %v1344
    %v1384 = vsub.f32 %v1380, %v1345
    %v1385 = vsub.f32 %v1381, %v1346
    %v1386 = vsub.f32 %v1382, %v1347
    %vm1387 = vcmp.gt.f32.partialorder %v1383, 1.0
    %vm1388 = vcmp.gt.f32.partialorder %v1384, 1.0
    %vm1389 = vcmp.gt.f32.partialorder %v1385, 1.0
    %vm1390 = vcmp.gt.f32.partialorder %v1386, 1.0
    %v1391 = vsel %vm1387, 1, 0
    %v1392 = vsel %vm1388, 1, 0
    %v1393 = vsel %vm1389, 1, 0
    %v1394 = vsel %vm1390, 1, 0
    %v1395 = vcvt.s32.f32 %v1391
    %v1396 = vcvt.s32.f32 %v1392
    %v1397 = vcvt.s32.f32 %v1393
    %v1398 = vcvt.s32.f32 %v1394
    %v1399 = vpack.c.bf16 %v1395, %v1395
    %v1400 = vpack.c.bf16 %v1396, %v1396
    %v1401 = vpack.c.bf16 %v1397, %v1397
    %v1402 = vpack.c.bf16 %v1398, %v1398
    %v1407 = vunpack.c.l.b16 %v1399
    %v1408 = vunpack.c.l.b16 %v1400
    %v1409 = vunpack.c.l.b16 %v1401
    %v1410 = vunpack.c.l.b16 %v1402
    %v1411 = vpack.c.b16 %v1408, %v1407
    %v1412 = vpack.c.b16 %v1410, %v1409
    %s1415 = scalar_lea.vmem [#allocation12], 16
    %1416 = vst [vmem:[%s1415] sm:$0xff] %v1411
    %1417 = vst [vmem:[%s1415 + $0x8] sm:$0xff] %v1412
    %s1418 = scalar_lea.vmem [#allocation13], 32
    %1419 = vst [vmem:[%s1418] sm:$0xff] %v1383
    %1420 = vst [vmem:[%s1418 + $0x8] sm:$0xff] %v1384
    %1421 = vst [vmem:[%s1418 + $0x10] sm:$0xff] %v1385
    %1422 = vst [vmem:[%s1418 + $0x18] sm:$0xff] %v1386
    %v1423 = vmul.f32 %v1383, 0.88
    %v1424 = vmul.f32 %v1384, 0.88
    %v1425 = vmul.f32 %v1385, 0.88
    %v1426 = vmul.f32 %v1386, 0.88
    %s1427 = scalar_lea.vmem [#allocation3], 64
    %v1428 = vld [vmem:[%s1427] sm:$0xff]
    %v1429 = vld [vmem:[%s1427 + $0x8] sm:$0xff]
    %v1430 = vld [vmem:[%s1427 + $0x10] sm:$0xff]
    %v1431 = vld [vmem:[%s1427 + $0x18] sm:$0xff]
    %v1432 = vadd.f32 %v1423, %v1428
    %v1433 = vadd.f32 %v1424, %v1429
    %v1434 = vadd.f32 %v1425, %v1430
    %v1435 = vadd.f32 %v1426, %v1431
    %v1436 = vsub.f32 %v1432, %v1395
    %v1437 = vsub.f32 %v1433, %v1396
    %v1438 = vsub.f32 %v1434, %v1397
    %v1439 = vsub.f32 %v1435, %v1398
    %vm1440 = vcmp.gt.f32.partialorder %v1436, 1.0
    %vm1441 = vcmp.gt.f32.partialorder %v1437, 1.0
    %vm1442 = vcmp.gt.f32.partialorder %v1438, 1.0
    %vm1443 = vcmp.gt.f32.partialorder %v1439, 1.0
    %v1444 = vsel %vm1440, 1, 0
    %v1445 = vsel %vm1441, 1, 0
    %v1446 = vsel %vm1442, 1, 0
    %v1447 = vsel %vm1443, 1, 0
    %v1448 = vcvt.s32.f32 %v1444
    %v1449 = vcvt.s32.f32 %v1445
    %v1450 = vcvt.s32.f32 %v1446
    %v1451 = vcvt.s32.f32 %v1447
    %v1452 = vpack.c.bf16 %v1448, %v1448
    %v1453 = vpack.c.bf16 %v1449, %v1449
    %v1454 = vpack.c.bf16 %v1450, %v1450
    %v1455 = vpack.c.bf16 %v1451, %v1451
    %v1460 = vunpack.c.l.b16 %v1452
    %v1461 = vunpack.c.l.b16 %v1453
    %v1462 = vunpack.c.l.b16 %v1454
    %v1463 = vunpack.c.l.b16 %v1455
    %v1464 = vpack.c.b16 %v1461, %v1460
    %v1465 = vpack.c.b16 %v1463, %v1462
    %s1468 = scalar_lea.vmem [#allocation12], 32
    %1469 = vst [vmem:[%s1468] sm:$0xff] %v1464
    %1470 = vst [vmem:[%s1468 + $0x8] sm:$0xff] %v1465
    %s1471 = scalar_lea.vmem [#allocation13], 64
    %1472 = vst [vmem:[%s1471] sm:$0xff] %v1436
    %1473 = vst [vmem:[%s1471 + $0x8] sm:$0xff] %v1437
    %1474 = vst [vmem:[%s1471 + $0x10] sm:$0xff] %v1438
    %1475 = vst [vmem:[%s1471 + $0x18] sm:$0xff] %v1439
    %v1476 = vmul.f32 %v1436, 0.88
    %v1477 = vmul.f32 %v1437, 0.88
    %v1478 = vmul.f32 %v1438, 0.88
    %v1479 = vmul.f32 %v1439, 0.88
    %s1480 = scalar_lea.vmem [#allocation3], 96
    %v1481 = vld [vmem:[%s1480] sm:$0xff]
    %v1482 = vld [vmem:[%s1480 + $0x8] sm:$0xff]
    %v1483 = vld [vmem:[%s1480 + $0x10] sm:$0xff]
    %v1484 = vld [vmem:[%s1480 + $0x18] sm:$0xff]
    %v1485 = vadd.f32 %v1476, %v1481
    %v1486 = vadd.f32 %v1477, %v1482
    %v1487 = vadd.f32 %v1478, %v1483
    %v1488 = vadd.f32 %v1479, %v1484
    %v1489 = vsub.f32 %v1485, %v1448
    %v1490 = vsub.f32 %v1486, %v1449
    %v1491 = vsub.f32 %v1487, %v1450
    %v1492 = vsub.f32 %v1488, %v1451
    %vm1493 = vcmp.gt.f32.partialorder %v1489, 1.0
    %vm1494 = vcmp.gt.f32.partialorder %v1490, 1.0
    %vm1495 = vcmp.gt.f32.partialorder %v1491, 1.0
    %vm1496 = vcmp.gt.f32.partialorder %v1492, 1.0
    %v1497 = vsel %vm1493, 1, 0
    %v1498 = vsel %vm1494, 1, 0
    %v1499 = vsel %vm1495, 1, 0
    %v1500 = vsel %vm1496, 1, 0
    %v1501 = vcvt.s32.f32 %v1497
    %v1502 = vcvt.s32.f32 %v1498
    %v1503 = vcvt.s32.f32 %v1499
    %v1504 = vcvt.s32.f32 %v1500
    %v1505 = vpack.c.bf16 %v1501, %v1501
    %v1506 = vpack.c.bf16 %v1502, %v1502
    %v1507 = vpack.c.bf16 %v1503, %v1503
    %v1508 = vpack.c.bf16 %v1504, %v1504
    %v1513 = vunpack.c.l.b16 %v1505
    %v1514 = vunpack.c.l.b16 %v1506
    %v1515 = vunpack.c.l.b16 %v1507
    %v1516 = vunpack.c.l.b16 %v1508
    %v1517 = vpack.c.b16 %v1514, %v1513
    %v1518 = vpack.c.b16 %v1516, %v1515
    %s1521 = scalar_lea.vmem [#allocation12], 48
    %1522 = vst [vmem:[%s1521] sm:$0xff] %v1517
    %1523 = vst [vmem:[%s1521 + $0x8] sm:$0xff] %v1518
    %s1524 = scalar_lea.vmem [#allocation13], 96
    %1525 = vst [vmem:[%s1524] sm:$0xff] %v1489
    %1526 = vst [vmem:[%s1524 + $0x8] sm:$0xff] %v1490
    %1527 = vst [vmem:[%s1524 + $0x10] sm:$0xff] %v1491
    %1528 = vst [vmem:[%s1524 + $0x18] sm:$0xff] %v1492
    %v1529 = vmul.f32 %v1489, 0.88
    %v1530 = vmul.f32 %v1490, 0.88
    %v1531 = vmul.f32 %v1491, 0.88
    %v1532 = vmul.f32 %v1492, 0.88
    %s1533 = scalar_lea.vmem [#allocation3], 128
    %v1534 = vld [vmem:[%s1533] sm:$0xff]
    %v1535 = vld [vmem:[%s1533 + $0x8] sm:$0xff]
    %v1536 = vld [vmem:[%s1533 + $0x10] sm:$0xff]
    %v1537 = vld [vmem:[%s1533 + $0x18] sm:$0xff]
    %v1538 = vadd.f32 %v1529, %v1534
    %v1539 = vadd.f32 %v1530, %v1535
    %v1540 = vadd.f32 %v1531, %v1536
    %v1541 = vadd.f32 %v1532, %v1537
    %v1542 = vsub.f32 %v1538, %v1501
    %v1543 = vsub.f32 %v1539, %v1502
    %v1544 = vsub.f32 %v1540, %v1503
    %v1545 = vsub.f32 %v1541, %v1504
    %vm1546 = vcmp.gt.f32.partialorder %v1542, 1.0
    %vm1547 = vcmp.gt.f32.partialorder %v1543, 1.0
    %vm1548 = vcmp.gt.f32.partialorder %v1544, 1.0
    %vm1549 = vcmp.gt.f32.partialorder %v1545, 1.0
    %v1550 = vsel %vm1546, 1, 0
    %v1551 = vsel %vm1547, 1, 0
    %v1552 = vsel %vm1548, 1, 0
    %v1553 = vsel %vm1549, 1, 0
    %v1554 = vcvt.s32.f32 %v1550
    %v1555 = vcvt.s32.f32 %v1551
    %v1556 = vcvt.s32.f32 %v1552
    %v1557 = vcvt.s32.f32 %v1553
    %v1558 = vpack.c.bf16 %v1554, %v1554
    %v1559 = vpack.c.bf16 %v1555, %v1555
    %v1560 = vpack.c.bf16 %v1556, %v1556
    %v1561 = vpack.c.bf16 %v1557, %v1557
    %v1566 = vunpack.c.l.b16 %v1558
    %v1567 = vunpack.c.l.b16 %v1559
    %v1568 = vunpack.c.l.b16 %v1560
    %v1569 = vunpack.c.l.b16 %v1561
    %v1570 = vpack.c.b16 %v1567, %v1566
    %v1571 = vpack.c.b16 %v1569, %v1568
    %s1574 = scalar_lea.vmem [#allocation12], 64
    %1575 = vst [vmem:[%s1574] sm:$0xff] %v1570
    %1576 = vst [vmem:[%s1574 + $0x8] sm:$0xff] %v1571
    %s1577 = scalar_lea.vmem [#allocation13], 128
    %1578 = vst [vmem:[%s1577] sm:$0xff] %v1542
    %1579 = vst [vmem:[%s1577 + $0x8] sm:$0xff] %v1543
    %1580 = vst [vmem:[%s1577 + $0x10] sm:$0xff] %v1544
    %1581 = vst [vmem:[%s1577 + $0x18] sm:$0xff] %v1545
    %v1582 = vmul.f32 %v1542, 0.88
    %v1583 = vmul.f32 %v1543, 0.88
    %v1584 = vmul.f32 %v1544, 0.88
    %v1585 = vmul.f32 %v1545, 0.88
    %s1586 = scalar_lea.vmem [#allocation3], 160
    %v1587 = vld [vmem:[%s1586] sm:$0xff]
    %v1588 = vld [vmem:[%s1586 + $0x8] sm:$0xff]
    %v1589 = vld [vmem:[%s1586 + $0x10] sm:$0xff]
    %v1590 = vld [vmem:[%s1586 + $0x18] sm:$0xff]
    %v1591 = vadd.f32 %v1582, %v1587
    %v1592 = vadd.f32 %v1583, %v1588
    %v1593 = vadd.f32 %v1584, %v1589
    %v1594 = vadd.f32 %v1585, %v1590
    %v1595 = vsub.f32 %v1591, %v1554
    %v1596 = vsub.f32 %v1592, %v1555
    %v1597 = vsub.f32 %v1593, %v1556
    %v1598 = vsub.f32 %v1594, %v1557
    %vm1599 = vcmp.gt.f32.partialorder %v1595, 1.0
    %vm1600 = vcmp.gt.f32.partialorder %v1596, 1.0
    %vm1601 = vcmp.gt.f32.partialorder %v1597, 1.0
    %vm1602 = vcmp.gt.f32.partialorder %v1598, 1.0
    %v1603 = vsel %vm1599, 1, 0
    %v1604 = vsel %vm1600, 1, 0
    %v1605 = vsel %vm1601, 1, 0
    %v1606 = vsel %vm1602, 1, 0
    %v1607 = vcvt.s32.f32 %v1603
    %v1608 = vcvt.s32.f32 %v1604
    %v1609 = vcvt.s32.f32 %v1605
    %v1610 = vcvt.s32.f32 %v1606
    %v1611 = vpack.c.bf16 %v1607, %v1607
    %v1612 = vpack.c.bf16 %v1608, %v1608
    %v1613 = vpack.c.bf16 %v1609, %v1609
    %v1614 = vpack.c.bf16 %v1610, %v1610
    %v1619 = vunpack.c.l.b16 %v1611
    %v1620 = vunpack.c.l.b16 %v1612
    %v1621 = vunpack.c.l.b16 %v1613
    %v1622 = vunpack.c.l.b16 %v1614
    %v1623 = vpack.c.b16 %v1620, %v1619
    %v1624 = vpack.c.b16 %v1622, %v1621
    %s1627 = scalar_lea.vmem [#allocation12], 80
    %1628 = vst [vmem:[%s1627] sm:$0xff] %v1623
    %1629 = vst [vmem:[%s1627 + $0x8] sm:$0xff] %v1624
    %s1630 = scalar_lea.vmem [#allocation13], 160
    %1631 = vst [vmem:[%s1630] sm:$0xff] %v1595
    %1632 = vst [vmem:[%s1630 + $0x8] sm:$0xff] %v1596
    %1633 = vst [vmem:[%s1630 + $0x10] sm:$0xff] %v1597
    %1634 = vst [vmem:[%s1630 + $0x18] sm:$0xff] %v1598
    %v1635 = vmul.f32 %v1595, 0.88
    %v1636 = vmul.f32 %v1596, 0.88
    %v1637 = vmul.f32 %v1597, 0.88
    %v1638 = vmul.f32 %v1598, 0.88
    %s1639 = scalar_lea.vmem [#allocation3], 192
    %v1640 = vld [vmem:[%s1639] sm:$0xff]
    %v1641 = vld [vmem:[%s1639 + $0x8] sm:$0xff]
    %v1642 = vld [vmem:[%s1639 + $0x10] sm:$0xff]
    %v1643 = vld [vmem:[%s1639 + $0x18] sm:$0xff]
    %v1644 = vadd.f32 %v1635, %v1640
    %v1645 = vadd.f32 %v1636, %v1641
    %v1646 = vadd.f32 %v1637, %v1642
    %v1647 = vadd.f32 %v1638, %v1643
    %v1648 = vsub.f32 %v1644, %v1607
    %v1649 = vsub.f32 %v1645, %v1608
    %v1650 = vsub.f32 %v1646, %v1609
    %v1651 = vsub.f32 %v1647, %v1610
    %vm1652 = vcmp.gt.f32.partialorder %v1648, 1.0
    %vm1653 = vcmp.gt.f32.partialorder %v1649, 1.0
    %vm1654 = vcmp.gt.f32.partialorder %v1650, 1.0
    %vm1655 = vcmp.gt.f32.partialorder %v1651, 1.0
    %v1656 = vsel %vm1652, 1, 0
    %v1657 = vsel %vm1653, 1, 0
    %v1658 = vsel %vm1654, 1, 0
    %v1659 = vsel %vm1655, 1, 0
    %v1660 = vcvt.s32.f32 %v1656
    %v1661 = vcvt.s32.f32 %v1657
    %v1662 = vcvt.s32.f32 %v1658
    %v1663 = vcvt.s32.f32 %v1659
    %v1664 = vpack.c.bf16 %v1660, %v1660
    %v1665 = vpack.c.bf16 %v1661, %v1661
    %v1666 = vpack.c.bf16 %v1662, %v1662
    %v1667 = vpack.c.bf16 %v1663, %v1663
    %v1672 = vunpack.c.l.b16 %v1664
    %v1673 = vunpack.c.l.b16 %v1665
    %v1674 = vunpack.c.l.b16 %v1666
    %v1675 = vunpack.c.l.b16 %v1667
    %v1676 = vpack.c.b16 %v1673, %v1672
    %v1677 = vpack.c.b16 %v1675, %v1674
    %s1680 = scalar_lea.vmem [#allocation12], 96
    %1681 = vst [vmem:[%s1680] sm:$0xff] %v1676
    %1682 = vst [vmem:[%s1680 + $0x8] sm:$0xff] %v1677
    %s1683 = scalar_lea.vmem [#allocation13], 192
    %1684 = vst [vmem:[%s1683] sm:$0xff] %v1648
    %1685 = vst [vmem:[%s1683 + $0x8] sm:$0xff] %v1649
    %1686 = vst [vmem:[%s1683 + $0x10] sm:$0xff] %v1650
    %1687 = vst [vmem:[%s1683 + $0x18] sm:$0xff] %v1651
    %v1688 = vmul.f32 %v1648, 0.88
    %v1689 = vmul.f32 %v1649, 0.88
    %v1690 = vmul.f32 %v1650, 0.88
    %v1691 = vmul.f32 %v1651, 0.88
    %s1692 = scalar_lea.vmem [#allocation3], 224
    %v1693 = vld [vmem:[%s1692] sm:$0xff]
    %v1694 = vld [vmem:[%s1692 + $0x8] sm:$0xff]
    %v1695 = vld [vmem:[%s1692 + $0x10] sm:$0xff]
    %v1696 = vld [vmem:[%s1692 + $0x18] sm:$0xff]
    %v1697 = vadd.f32 %v1688, %v1693
    %v1698 = vadd.f32 %v1689, %v1694
    %v1699 = vadd.f32 %v1690, %v1695
    %v1700 = vadd.f32 %v1691, %v1696
    %v1701 = vsub.f32 %v1697, %v1660
    %v1702 = vsub.f32 %v1698, %v1661
    %v1703 = vsub.f32 %v1699, %v1662
    %v1704 = vsub.f32 %v1700, %v1663
    %vm1705 = vcmp.gt.f32.partialorder %v1701, 1.0
    %vm1706 = vcmp.gt.f32.partialorder %v1702, 1.0
    %vm1707 = vcmp.gt.f32.partialorder %v1703, 1.0
    %vm1708 = vcmp.gt.f32.partialorder %v1704, 1.0
    %v1709 = vsel %vm1705, 1, 0
    %v1710 = vsel %vm1706, 1, 0
    %v1711 = vsel %vm1707, 1, 0
    %v1712 = vsel %vm1708, 1, 0
    %v1713 = vcvt.s32.f32 %v1709
    %v1714 = vcvt.s32.f32 %v1710
    %v1715 = vcvt.s32.f32 %v1711
    %v1716 = vcvt.s32.f32 %v1712
    %v1717 = vpack.c.bf16 %v1713, %v1713
    %v1718 = vpack.c.bf16 %v1714, %v1714
    %v1719 = vpack.c.bf16 %v1715, %v1715
    %v1720 = vpack.c.bf16 %v1716, %v1716
    %v1725 = vunpack.c.l.b16 %v1717
    %v1726 = vunpack.c.l.b16 %v1718
    %v1727 = vunpack.c.l.b16 %v1719
    %v1728 = vunpack.c.l.b16 %v1720
    %v1729 = vpack.c.b16 %v1726, %v1725
    %v1730 = vpack.c.b16 %v1728, %v1727
    %s1733 = scalar_lea.vmem [#allocation12], 112
    %1734 = vst [vmem:[%s1733] sm:$0xff] %v1729
    %1735 = vst [vmem:[%s1733 + $0x8] sm:$0xff] %v1730
    %s1736 = scalar_lea.vmem [#allocation13], 224
    %1737 = vst [vmem:[%s1736] sm:$0xff] %v1701
    %1738 = vst [vmem:[%s1736 + $0x8] sm:$0xff] %v1702
    %1739 = vst [vmem:[%s1736 + $0x10] sm:$0xff] %v1703
    %1740 = vst [vmem:[%s1736 + $0x18] sm:$0xff] %v1704
    %1741 = vst [vmem:[#allocation2] sm:$0xff] %v1701
    %1742 = vst [vmem:[#allocation2 + $0x8] sm:$0xff] %v1702
    %1743 = vst [vmem:[#allocation2 + $0x10] sm:$0xff] %v1703
    %1744 = vst [vmem:[#allocation2 + $0x18] sm:$0xff] %v1704
    %v1745 = vld [vmem:[#allocation12] sm:$0xff]
    %v1746 = vld [vmem:[#allocation12 + $0x8] sm:$0xff]
    %v1747 = vld [vmem:[#allocation12 + $0x10] sm:$0xff]
    %v1748 = vld [vmem:[#allocation12 + $0x18] sm:$0xff]
    %v1749 = vld [vmem:[#allocation12 + $0x20] sm:$0xff]
    %v1750 = vld [vmem:[#allocation12 + $0x28] sm:$0xff]
    %v1751 = vld [vmem:[#allocation12 + $0x30] sm:$0xff]
    %v1752 = vld [vmem:[#allocation12 + $0x38] sm:$0xff]
    %v1753 = vld [vmem:[#allocation12 + $0x40] sm:$0xff]
    %v1754 = vld [vmem:[#allocation12 + $0x48] sm:$0xff]
    %v1755 = vld [vmem:[#allocation12 + $0x50] sm:$0xff]
    %v1756 = vld [vmem:[#allocation12 + $0x58] sm:$0xff]
    %v1757 = vld [vmem:[#allocation12 + $0x60] sm:$0xff]
    %v1758 = vld [vmem:[#allocation12 + $0x68] sm:$0xff]
    %v1759 = vld [vmem:[#allocation12 + $0x70] sm:$0xff]
    %v1760 = vld [vmem:[#allocation12 + $0x78] sm:$0xff]
    %v1761 = vld [vmem:[#allocation10] sm:$0xf]
    %v1762 = vld [vmem:[#allocation10 + $0x4] sm:$0xf]
    %v1763 = vld [vmem:[#allocation10 + $0x8] sm:$0xf]
    %v1764 = vld [vmem:[#allocation10 + $0xc] sm:$0xf]
    %v1765 = vld [vmem:[#allocation10 + $0x10] sm:$0xf]
    %v1766 = vld [vmem:[#allocation10 + $0x14] sm:$0xf]
    %v1767 = vld [vmem:[#allocation10 + $0x18] sm:$0xf]
    %v1768 = vld [vmem:[#allocation10 + $0x1c] sm:$0xf]
    %v1769 = vld [vmem:[#allocation10 + $0x20] sm:$0xf]
    %v1770 = vld [vmem:[#allocation10 + $0x24] sm:$0xf]
    %v1771 = vld [vmem:[#allocation10 + $0x28] sm:$0xf]
    %v1772 = vld [vmem:[#allocation10 + $0x2c] sm:$0xf]
    %v1773 = vld [vmem:[#allocation10 + $0x30] sm:$0xf]
    %v1774 = vld [vmem:[#allocation10 + $0x34] sm:$0xf]
    %v1775 = vld [vmem:[#allocation10 + $0x38] sm:$0xf]
    %v1776 = vld [vmem:[#allocation10 + $0x3c] sm:$0xf]
    %v1777 = vld [vmem:[#allocation10 + $0x40] sm:$0xf]
    %v1778 = vld [vmem:[#allocation10 + $0x44] sm:$0xf]
    %v1779 = vld [vmem:[#allocation10 + $0x48] sm:$0xf]
    %v1780 = vld [vmem:[#allocation10 + $0x4c] sm:$0xf]
    %v1781 = vld [vmem:[#allocation10 + $0x50] sm:$0xf]
    %v1782 = vld [vmem:[#allocation10 + $0x54] sm:$0xf]
    %v1783 = vld [vmem:[#allocation10 + $0x58] sm:$0xf]
    %v1784 = vld [vmem:[#allocation10 + $0x5c] sm:$0xf]
    %v1785 = vld [vmem:[#allocation10 + $0x60] sm:$0xf]
    %v1786 = vld [vmem:[#allocation10 + $0x64] sm:$0xf]
    %v1787 = vld [vmem:[#allocation10 + $0x68] sm:$0xf]
    %v1788 = vld [vmem:[#allocation10 + $0x6c] sm:$0xf]
    %v1789 = vld [vmem:[#allocation10 + $0x70] sm:$0xf]
    %v1790 = vld [vmem:[#allocation10 + $0x74] sm:$0xf]
    %v1791 = vld [vmem:[#allocation10 + $0x78] sm:$0xf]
    %v1792 = vld [vmem:[#allocation10 + $0x7c] sm:$0xf]
    %v1793 = vld [vmem:[#allocation10 + $0x80] sm:$0xf]
    %v1794 = vld [vmem:[#allocation10 + $0x84] sm:$0xf]
    %v1795 = vld [vmem:[#allocation10 + $0x88] sm:$0xf]
    %v1796 = vld [vmem:[#allocation10 + $0x8c] sm:$0xf]
    %v1797 = vld [vmem:[#allocation10 + $0x90] sm:$0xf]
    %v1798 = vld [vmem:[#allocation10 + $0x94] sm:$0xf]
    %v1799 = vld [vmem:[#allocation10 + $0x98] sm:$0xf]
    %v1800 = vld [vmem:[#allocation10 + $0x9c] sm:$0xf]
    %v1801 = vld [vmem:[#allocation10 + $0xa0] sm:$0xf]
    %v1802 = vld [vmem:[#allocation10 + $0xa4] sm:$0xf]
    %v1803 = vld [vmem:[#allocation10 + $0xa8] sm:$0xf]
    %v1804 = vld [vmem:[#allocation10 + $0xac] sm:$0xf]
    %v1805 = vld [vmem:[#allocation10 + $0xb0] sm:$0xf]
    %v1806 = vld [vmem:[#allocation10 + $0xb4] sm:$0xf]
    %v1807 = vld [vmem:[#allocation10 + $0xb8] sm:$0xf]
    %v1808 = vld [vmem:[#allocation10 + $0xbc] sm:$0xf]
    %v1809 = vld [vmem:[#allocation10 + $0xc0] sm:$0xf]
    %v1810 = vld [vmem:[#allocation10 + $0xc4] sm:$0xf]
    %v1811 = vld [vmem:[#allocation10 + $0xc8] sm:$0xf]
    %v1812 = vld [vmem:[#allocation10 + $0xcc] sm:$0xf]
    %v1813 = vld [vmem:[#allocation10 + $0xd0] sm:$0xf]
    %v1814 = vld [vmem:[#allocation10 + $0xd4] sm:$0xf]
    %v1815 = vld [vmem:[#allocation10 + $0xd8] sm:$0xf]
    %v1816 = vld [vmem:[#allocation10 + $0xdc] sm:$0xf]
    %v1817 = vld [vmem:[#allocation10 + $0xe0] sm:$0xf]
    %v1818 = vld [vmem:[#allocation10 + $0xe4] sm:$0xf]
    %v1819 = vld [vmem:[#allocation10 + $0xe8] sm:$0xf]
    %v1820 = vld [vmem:[#allocation10 + $0xec] sm:$0xf]
    %v1821 = vld [vmem:[#allocation10 + $0xf0] sm:$0xf]
    %v1822 = vld [vmem:[#allocation10 + $0xf4] sm:$0xf]
    %v1823 = vld [vmem:[#allocation10 + $0xf8] sm:$0xf]
    %v1824 = vld [vmem:[#allocation10 + $0xfc] sm:$0xf]
    %v1825 = vld [vmem:[%s5] sm:$0x1]
    %v1827 = vlaneseq
    %v1828 = vshrl.u32 %v1827, 7
    %v1829 = vsub.s32 0, %v1828
    %v1830 = vrot.slane %v1825, %v1829
    %v1848 = vunpack.c.l.b16 %v1745
    %v1849 = vunpack.c.h.b16 %v1745
    %v1850 = vunpack.c.l.b16 %v1746
    %v1851 = vunpack.c.h.b16 %v1746
    %v1852 = vunpack.c.l.b16 %v1747
    %v1853 = vunpack.c.h.b16 %v1747
    %v1854 = vunpack.c.l.b16 %v1748
    %v1855 = vunpack.c.h.b16 %v1748
    %v1856 = vunpack.c.l.b16 %v1749
    %v1857 = vunpack.c.h.b16 %v1749
    %v1858 = vunpack.c.l.b16 %v1750
    %v1859 = vunpack.c.h.b16 %v1750
    %v1860 = vunpack.c.l.b16 %v1751
    %v1861 = vunpack.c.h.b16 %v1751
    %v1862 = vunpack.c.l.b16 %v1752
    %v1863 = vunpack.c.h.b16 %v1752
    %v1864 = vunpack.c.l.b16 %v1753
    %v1865 = vunpack.c.h.b16 %v1753
    %v1866 = vunpack.c.l.b16 %v1754
    %v1867 = vunpack.c.h.b16 %v1754
    %v1868 = vunpack.c.l.b16 %v1755
    %v1869 = vunpack.c.h.b16 %v1755
    %v1870 = vunpack.c.l.b16 %v1756
    %v1871 = vunpack.c.h.b16 %v1756
    %v1872 = vunpack.c.l.b16 %v1757
    %v1873 = vunpack.c.h.b16 %v1757
    %v1874 = vunpack.c.l.b16 %v1758
    %v1875 = vunpack.c.h.b16 %v1758
    %v1876 = vunpack.c.l.b16 %v1759
    %v1877 = vunpack.c.h.b16 %v1759
    %v1878 = vunpack.c.l.b16 %v1760
    %v1879 = vunpack.c.h.b16 %v1760
    %v1880 = vpack.c.b16 %v1852, %v1848
    %v1881 = vpack.c.b16 %v1853, %v1849
    %v1882 = vpack.c.b16 %v1854, %v1850
    %v1883 = vpack.c.b16 %v1855, %v1851
    %v1884 = vpack.c.b16 %v1860, %v1856
    %v1885 = vpack.c.b16 %v1861, %v1857
    %v1886 = vpack.c.b16 %v1862, %v1858
    %v1887 = vpack.c.b16 %v1863, %v1859
    %v1888 = vpack.c.b16 %v1868, %v1864
    %v1889 = vpack.c.b16 %v1869, %v1865
    %v1890 = vpack.c.b16 %v1870, %v1866
    %v1891 = vpack.c.b16 %v1871, %v1867
    %v1892 = vpack.c.b16 %v1876, %v1872
    %v1893 = vpack.c.b16 %v1877, %v1873
    %v1894 = vpack.c.b16 %v1878, %v1874
    %v1895 = vpack.c.b16 %v1879, %v1875
    %v1976 = vunpack.c.l.b16 %v1761
    %v1977 = vunpack.c.l.b16 %v1762
    %v1978 = vunpack.c.l.b16 %v1763
    %v1979 = vunpack.c.l.b16 %v1764
    %v1980 = vunpack.c.l.b16 %v1765
    %v1981 = vunpack.c.l.b16 %v1766
    %v1982 = vunpack.c.l.b16 %v1767
    %v1983 = vunpack.c.l.b16 %v1768
    %v1984 = vunpack.c.l.b16 %v1769
    %v1985 = vunpack.c.l.b16 %v1770
    %v1986 = vunpack.c.l.b16 %v1771
    %v1987 = vunpack.c.l.b16 %v1772
    %v1988 = vunpack.c.l.b16 %v1773
    %v1989 = vunpack.c.l.b16 %v1774
    %v1990 = vunpack.c.l.b16 %v1775
    %v1991 = vunpack.c.l.b16 %v1776
    %v1992 = vunpack.c.l.b16 %v1777
    %v1993 = vunpack.c.l.b16 %v1778
    %v1994 = vunpack.c.l.b16 %v1779
    %v1995 = vunpack.c.l.b16 %v1780
    %v1996 = vunpack.c.l.b16 %v1781
    %v1997 = vunpack.c.l.b16 %v1782
    %v1998 = vunpack.c.l.b16 %v1783
    %v1999 = vunpack.c.l.b16 %v1784
    %v2000 = vunpack.c.l.b16 %v1785
    %v2001 = vunpack.c.l.b16 %v1786
    %v2002 = vunpack.c.l.b16 %v1787
    %v2003 = vunpack.c.l.b16 %v1788
    %v2004 = vunpack.c.l.b16 %v1789
    %v2005 = vunpack.c.l.b16 %v1790
    %v2006 = vunpack.c.l.b16 %v1791
    %v2007 = vunpack.c.l.b16 %v1792
    %v2008 = vunpack.c.l.b16 %v1793
    %v2009 = vunpack.c.l.b16 %v1794
    %v2010 = vunpack.c.l.b16 %v1795
    %v2011 = vunpack.c.l.b16 %v1796
    %v2012 = vunpack.c.l.b16 %v1797
    %v2013 = vunpack.c.l.b16 %v1798
    %v2014 = vunpack.c.l.b16 %v1799
    %v2015 = vunpack.c.l.b16 %v1800
    %v2016 = vunpack.c.l.b16 %v1801
    %v2017 = vunpack.c.l.b16 %v1802
    %v2018 = vunpack.c.l.b16 %v1803
    %v2019 = vunpack.c.l.b16 %v1804
    %v2020 = vunpack.c.l.b16 %v1805
    %v2021 = vunpack.c.l.b16 %v1806
    %v2022 = vunpack.c.l.b16 %v1807
    %v2023 = vunpack.c.l.b16 %v1808
    %v2024 = vunpack.c.l.b16 %v1809
    %v2025 = vunpack.c.l.b16 %v1810
    %v2026 = vunpack.c.l.b16 %v1811
    %v2027 = vunpack.c.l.b16 %v1812
    %v2028 = vunpack.c.l.b16 %v1813
    %v2029 = vunpack.c.l.b16 %v1814
    %v2030 = vunpack.c.l.b16 %v1815
    %v2031 = vunpack.c.l.b16 %v1816
    %v2032 = vunpack.c.l.b16 %v1817
    %v2033 = vunpack.c.l.b16 %v1818
    %v2034 = vunpack.c.l.b16 %v1819
    %v2035 = vunpack.c.l.b16 %v1820
    %v2036 = vunpack.c.l.b16 %v1821
    %v2037 = vunpack.c.l.b16 %v1822
    %v2038 = vunpack.c.l.b16 %v1823
    %v2039 = vunpack.c.l.b16 %v1824
    %v2040 = vpack.c.b16 %v1977, %v1976
    %v2041 = vpack.c.b16 %v1979, %v1978
    %v2042 = vpack.c.b16 %v1981, %v1980
    %v2043 = vpack.c.b16 %v1983, %v1982
    %v2044 = vpack.c.b16 %v1985, %v1984
    %v2045 = vpack.c.b16 %v1987, %v1986
    %v2046 = vpack.c.b16 %v1989, %v1988
    %v2047 = vpack.c.b16 %v1991, %v1990
    %v2048 = vpack.c.b16 %v1993, %v1992
    %v2049 = vpack.c.b16 %v1995, %v1994
    %v2050 = vpack.c.b16 %v1997, %v1996
    %v2051 = vpack.c.b16 %v1999, %v1998
    %v2052 = vpack.c.b16 %v2001, %v2000
    %v2053 = vpack.c.b16 %v2003, %v2002
    %v2054 = vpack.c.b16 %v2005, %v2004
    %v2055 = vpack.c.b16 %v2007, %v2006
    %v2056 = vpack.c.b16 %v2009, %v2008
    %v2057 = vpack.c.b16 %v2011, %v2010
    %v2058 = vpack.c.b16 %v2013, %v2012
    %v2059 = vpack.c.b16 %v2015, %v2014
    %v2060 = vpack.c.b16 %v2017, %v2016
    %v2061 = vpack.c.b16 %v2019, %v2018
    %v2062 = vpack.c.b16 %v2021, %v2020
    %v2063 = vpack.c.b16 %v2023, %v2022
    %v2064 = vpack.c.b16 %v2025, %v2024
    %v2065 = vpack.c.b16 %v2027, %v2026
    %v2066 = vpack.c.b16 %v2029, %v2028
    %v2067 = vpack.c.b16 %v2031, %v2030
    %v2068 = vpack.c.b16 %v2033, %v2032
    %v2069 = vpack.c.b16 %v2035, %v2034
    %v2070 = vpack.c.b16 %v2037, %v2036
    %v2071 = vpack.c.b16 %v2039, %v2038
    %2104 = vmatprep.subr.bf16.mxu0 0
    %2105 = vmatpush1.bf16.msra.mxu0 %v2047
    %2106 = vmatprep.subr.bf16.mxu0 0
    %2107 = vmatpush1.bf16.msra.mxu0 %v2046
    %2108 = vmatprep.subr.bf16.mxu0 0
    %2109 = vmatpush1.bf16.msra.mxu0 %v2045
    %2110 = vmatprep.subr.bf16.mxu0 0
    %2111 = vmatpush1.bf16.msra.mxu0 %v2044
    %2112 = vmatprep.subr.bf16.mxu0 0
    %2113 = vmatpush1.bf16.msra.mxu0 %v2043
    %2114 = vmatprep.subr.bf16.mxu0 0
    %2115 = vmatpush1.bf16.msra.mxu0 %v2042
    %2116 = vmatprep.subr.bf16.mxu0 0
    %2117 = vmatpush1.bf16.msra.mxu0 %v2041
    %2118 = vmatprep.subr.bf16.mxu0 0
    %2119 = vmatpush1.bf16.msra.mxu0 %v2040
    %2120 = vmatprep.subr.bf16.mxu0 0
    %2121 = vmatpush2.bf16.msra.mxu0 %v2055
    %2122 = vmatprep.subr.bf16.mxu0 0
    %2123 = vmatpush2.bf16.msra.mxu0 %v2054
    %2124 = vmatprep.subr.bf16.mxu0 0
    %2125 = vmatpush2.bf16.msra.mxu0 %v2053
    %2126 = vmatprep.subr.bf16.mxu0 0
    %2127 = vmatpush2.bf16.msra.mxu0 %v2052
    %2128 = vmatprep.subr.bf16.mxu0 0
    %2129 = vmatpush2.bf16.msra.mxu0 %v2051
    %2130 = vmatprep.subr.bf16.mxu0 0
    %2131 = vmatpush2.bf16.msra.mxu0 %v2050
    %2132 = vmatprep.subr.bf16.mxu0 0
    %2133 = vmatpush2.bf16.msra.mxu0 %v2049
    %2134 = vmatprep.subr.bf16.mxu0 0
    %2135 = vmatpush2.bf16.msra.mxu0 %v2048
    %2136 = vmatprep.mubr.bf16.mxu0 %v1881
    %2137 = vmatmul.mubr.bf16.gmra.mxu0 %v1880
    %v2138 = vpop.f32.mrf.mxu0
    %v2139 = vadd.f32 %v1830, %v2138
    %v2140 = vpop.f32.mrf.mxu0
    %v2141 = vpop.f32.mrf.mxu0
    %v2142 = vadd.f32 %v1830, %v2141
    %v2143 = vpop.f32.mrf.mxu0
    %2144 = vmatprep.mubr.bf16.mxu0 %v1885
    %2145 = vmatmul.mubr.bf16.gmra.mxu0 %v1884
    %v2146 = vpop.f32.mrf.mxu0
    %v2147 = vadd.f32 %v1830, %v2146
    %v2148 = vpop.f32.mrf.mxu0
    %v2149 = vpop.f32.mrf.mxu0
    %v2150 = vadd.f32 %v1830, %v2149
    %v2151 = vpop.f32.mrf.mxu0
    %2152 = vmatprep.mubr.bf16.mxu0 %v1889
    %2153 = vmatmul.mubr.bf16.gmra.mxu0 %v1888
    %v2154 = vpop.f32.mrf.mxu0
    %v2155 = vadd.f32 %v1830, %v2154
    %v2156 = vpop.f32.mrf.mxu0
    %v2157 = vpop.f32.mrf.mxu0
    %v2158 = vadd.f32 %v1830, %v2157
    %v2159 = vpop.f32.mrf.mxu0
    %2160 = vmatprep.mubr.bf16.mxu0 %v1893
    %2161 = vmatmul.mubr.bf16.gmra.mxu0 %v1892
    %v2162 = vpop.f32.mrf.mxu0
    %v2163 = vadd.f32 %v1830, %v2162
    %v2164 = vpop.f32.mrf.mxu0
    %v2165 = vpop.f32.mrf.mxu0
    %v2166 = vadd.f32 %v1830, %v2165
    %v2167 = vpop.f32.mrf.mxu0
    %2168 = vdwg.mxu0
    %2169 = vmatprep.subr.bf16.mxu0 0
    %2170 = vmatpush1.bf16.msra.mxu0 %v2063
    %2171 = vmatprep.subr.bf16.mxu0 0
    %2172 = vmatpush1.bf16.msra.mxu0 %v2062
    %2173 = vmatprep.subr.bf16.mxu0 0
    %2174 = vmatpush1.bf16.msra.mxu0 %v2061
    %2175 = vmatprep.subr.bf16.mxu0 0
    %2176 = vmatpush1.bf16.msra.mxu0 %v2060
    %2177 = vmatprep.subr.bf16.mxu0 0
    %2178 = vmatpush1.bf16.msra.mxu0 %v2059
    %2179 = vmatprep.subr.bf16.mxu0 0
    %2180 = vmatpush1.bf16.msra.mxu0 %v2058
    %2181 = vmatprep.subr.bf16.mxu0 0
    %2182 = vmatpush1.bf16.msra.mxu0 %v2057
    %2183 = vmatprep.subr.bf16.mxu0 0
    %2184 = vmatpush1.bf16.msra.mxu0 %v2056
    %2185 = vmatprep.subr.bf16.mxu0 0
    %2186 = vmatpush2.bf16.msra.mxu0 %v2071
    %2187 = vmatprep.subr.bf16.mxu0 0
    %2188 = vmatpush2.bf16.msra.mxu0 %v2070
    %2189 = vmatprep.subr.bf16.mxu0 0
    %2190 = vmatpush2.bf16.msra.mxu0 %v2069
    %2191 = vmatprep.subr.bf16.mxu0 0
    %2192 = vmatpush2.bf16.msra.mxu0 %v2068
    %2193 = vmatprep.subr.bf16.mxu0 0
    %2194 = vmatpush2.bf16.msra.mxu0 %v2067
    %2195 = vmatprep.subr.bf16.mxu0 0
    %2196 = vmatpush2.bf16.msra.mxu0 %v2066
    %2197 = vmatprep.subr.bf16.mxu0 0
    %2198 = vmatpush2.bf16.msra.mxu0 %v2065
    %2199 = vmatprep.subr.bf16.mxu0 0
    %2200 = vmatpush2.bf16.msra.mxu0 %v2064
    %2201 = vmatprep.mubr.bf16.mxu0 %v1883
    %2202 = vmatmul.mubr.bf16.gmra.mxu0 %v1882
    %v2203 = vpop.f32.mrf.mxu0
    %v2204 = vadd.f32 %v2139, %v2203
    %v2205 = vpop.f32.mrf.mxu0
    %v2206 = vpop.f32.mrf.mxu0
    %v2207 = vadd.f32 %v2142, %v2206
    %v2208 = vpop.f32.mrf.mxu0
    %2209 = vmatprep.mubr.bf16.mxu0 %v1887
    %2210 = vmatmul.mubr.bf16.gmra.mxu0 %v1886
    %v2211 = vpop.f32.mrf.mxu0
    %v2212 = vadd.f32 %v2147, %v2211
    %v2213 = vpop.f32.mrf.mxu0
    %v2214 = vpop.f32.mrf.mxu0
    %v2215 = vadd.f32 %v2150, %v2214
    %v2216 = vpop.f32.mrf.mxu0
    %2217 = vmatprep.mubr.bf16.mxu0 %v1891
    %2218 = vmatmul.mubr.bf16.gmra.mxu0 %v1890
    %v2219 = vpop.f32.mrf.mxu0
    %v2220 = vadd.f32 %v2155, %v2219
    %v2221 = vpop.f32.mrf.mxu0
    %v2222 = vpop.f32.mrf.mxu0
    %v2223 = vadd.f32 %v2158, %v2222
    %v2224 = vpop.f32.mrf.mxu0
    %2225 = vmatprep.mubr.bf16.mxu0 %v1895
    %2226 = vmatmul.mubr.bf16.gmra.mxu0 %v1894
    %v2227 = vpop.f32.mrf.mxu0
    %v2228 = vadd.f32 %v2163, %v2227
    %v2229 = vpop.f32.mrf.mxu0
    %v2230 = vpop.f32.mrf.mxu0
    %v2231 = vadd.f32 %v2166, %v2230
    %v2232 = vpop.f32.mrf.mxu0
    %2233 = vdwg.mxu0
    %2234 = vst [vmem:[#allocation15] sm:$0xff] %v2204
    %2235 = vst [vmem:[#allocation15 + $0x8] sm:$0xff] %v2207
    %2236 = vst [vmem:[#allocation15 + $0x10] sm:$0xff] %v2212
    %2237 = vst [vmem:[#allocation15 + $0x18] sm:$0xff] %v2215
    %2238 = vst [vmem:[#allocation15 + $0x20] sm:$0xff] %v2220
    %2239 = vst [vmem:[#allocation15 + $0x28] sm:$0xff] %v2223
    %2240 = vst [vmem:[#allocation15 + $0x30] sm:$0xff] %v2228
    %2241 = vst [vmem:[#allocation15 + $0x38] sm:$0xff] %v2231
    // Predicated region
    $region46: #{tpu_custom_call.1} parent=1 // pred_check
      _
    $region47: #{tpu_custom_call.1} parent=1 // pred_check_branch
      %2243 = sbr.rel (0) target = $region49
    $region48: #{tpu_custom_call.1} parent=1 // pred_region
      %s2245 = ssub.s32 2048, 2048
      %2246 = vsyncadd [#allocation6], %s2245
      %s2247 = sshll.u32 [#allocation12], 4
      %s2248 = int_to_ptr.vmem [resolvable:$true] %s2247
      %2253 = dma.vmem_to_hbm [thread:$0]  %s2248, 2048, %s6, [#allocation6], 256, 256, 16
    $region49: #{tpu_custom_call.1} parent=1 // pred_fallthru
      _
    // Predicated region
    $region50: #{tpu_custom_call.1} parent=1 // pred_check
      _
    $region51: #{tpu_custom_call.1} parent=1 // pred_check_branch
      %2255 = sbr.rel (0) target = $region53
    $region52: #{tpu_custom_call.1} parent=1 // pred_region
      %s2257 = ssub.s32 4096, 4096
      %2258 = vsyncadd [#allocation14], %s2257
      %s2259 = sshll.u32 [#allocation13], 4
      %s2260 = int_to_ptr.vmem [resolvable:$true] %s2259
      %2265 = dma.vmem_to_hbm [thread:$0]  %s2260, 4096, %s7, [#allocation14], 512, 512, 32
    $region53: #{tpu_custom_call.1} parent=1 // pred_fallthru
      _
    // Predicated region
    $region54: #{tpu_custom_call.1} parent=1 // pred_check
      _
    $region55: #{tpu_custom_call.1} parent=1 // pred_check_branch
      %2267 = sbr.rel (0) target = $region57
    $region56: #{tpu_custom_call.1} parent=1 // pred_region
      %s2269 = ssub.s32 1024, 1024
      %2270 = vsyncadd [#allocation14], %s2269
      %s2271 = sshll.u32 [#allocation15], 4
      %s2272 = int_to_ptr.vmem [resolvable:$true] %s2271
      %2277 = dma.vmem_to_hbm [thread:$0]  %s2272, 1024, %s8, [#allocation14], 128, 128, 8
    $region57: #{tpu_custom_call.1} parent=1 // pred_fallthru
      _
    // Predicated region
    $region58: #{tpu_custom_call.1} parent=1 // pred_check
      _
    $region59: #{tpu_custom_call.1} parent=1 // pred_check_branch
      %2279 = sbr.rel (0) target = $region61
    $region60: #{tpu_custom_call.1} parent=1 // pred_region
      %2280 = dma.done [#allocation6], 2048
    $region61: #{tpu_custom_call.1} parent=1 // pred_fallthru
      _
    // Predicated region
    $region62: #{tpu_custom_call.1} parent=1 // pred_check
      _
    $region63: #{tpu_custom_call.1} parent=1 // pred_check_branch
      %2282 = sbr.rel (0) target = $region65
    $region64: #{tpu_custom_call.1} parent=1 // pred_region
      %2283 = dma.done [#allocation14], 4096
    $region65: #{tpu_custom_call.1} parent=1 // pred_fallthru
      _
    // Predicated region
    $region66: #{tpu_custom_call.1} parent=1 // pred_check
      _
    $region67: #{tpu_custom_call.1} parent=1 // pred_check_branch
      %2285 = sbr.rel (0) target = $region69
    $region68: #{tpu_custom_call.1} parent=1 // pred_region
      %2286 = dma.done [#allocation14], 1024
    $region69: #{tpu_custom_call.1} parent=1 // pred_fallthru
      _
    %2287 = vsyncpa [#allocation5], 1
    %2288 = vsyncpa [#allocation8], 1
    %2289 = vsyncpa [#allocation11], 1
    %2290 = vsyncpa [#allocation6], 1
    %2291 = vsyncpa [#allocation14], 1

</llo_original>
